<compile_context>
chip_gen: v5e
topology: v5e:2x2
jax: 0.10.0
libtpu: 0.0.40
codegen_flags: <defaults>
</compile_context>

<pallas_src>
import functools

import jax
import jax.numpy as jnp
from jax import lax
from jax.experimental import pallas as pl
from jax.experimental.pallas import tpu as pltpu


# ----------------------------- Pallas kernels ------------------------------

def _linear_kernel(x_ref, w_ref, b_ref, o_ref):
    # o = x @ w + b     x: (TM, F), w: (F, D), b: (1, D)
    o_ref[...] = (
        jnp.dot(x_ref[...], w_ref[...], preferred_element_type=jnp.float32)
        + b_ref[...]
    )


def _gcn_layer_kernel(adjt_ref, h_ref, oscale_ref, iscale_ref, accin_ref,
                      out_ref, accout_ref, acc_sc):
    """One UUGCNLayer (weight=False) + LeakyReLU(0.5) + row L2-norm + residual.

    Grid: (n_dst_tiles, n_src_tiles); axis 1 (src) is the reduction axis.
      adjt_ref  : (TM, TK) bf16  adj^T tile (adj_t[dst, src], entries 0/1)
      h_ref     : (TK, D)  f32   current node features (src rows)
      oscale_ref: (TK, 1)  f32   rsqrt(clamp(out_deg, 1)) per src node
      iscale_ref: (TM, 1)  f32   rsqrt(clamp(in_deg, 1))  per dst node
      accin_ref : (TM, D)  f32   running residual sum (dst rows)
      out_ref   : (TM, D)  f32   normalized layer output
      accout_ref: (TM, D)  f32   accin + normalized layer output
      acc_sc    : (TM, D)  f32   VMEM accumulator scratch
    """
    k = pl.program_id(1)

    @pl.when(k == 0)
    def _init():
        acc_sc[...] = jnp.zeros_like(acc_sc)

    # out-degree scaling of the source features (per src row).
    h = h_ref[...] * oscale_ref[...]                        # (TK, D)
    adjt = adjt_ref[...].astype(jnp.float32)                # (TM, TK), 0/1 exact

    # message passing: rst[dst] = sum_src adj[src, dst] * h[src] == adj^T @ h
    acc_sc[...] += jnp.dot(adjt, h, preferred_element_type=jnp.float32)

    @pl.when(k == pl.num_programs(1) - 1)
    def _epilogue():
        rst = acc_sc[...] * iscale_ref[...]                 # in-degree scale
        rst = jnp.where(rst >= 0, rst, 0.5 * rst)           # LeakyReLU(0.5)
        # F.normalize(p=2, dim=1): x / max(||x||_2, 1e-12)
        nrm = jnp.sqrt(jnp.sum(rst * rst, axis=1, keepdims=True))
        normed = rst / jnp.maximum(nrm, 1e-12)
        out_ref[...] = normed
        accout_ref[...] = accin_ref[...] + normed


# ------------------------------ wrappers -----------------------------------

def _round_up(x, m):
    return (x + m - 1) // m * m


def _pad2(a, rows, cols):
    return jnp.pad(a, ((0, rows - a.shape[0]), (0, cols - a.shape[1])))


def _choose_tile(n):
    if n >= 512:
        return 512
    if n >= 256:
        return 256
    return 128


def linear_transform(x, w, b, *, tile_m):
    """embed = x @ w + b   (x: (N_pad, F_pad), w: (F_pad, D_pad), b: (1, D_pad))."""
    n, f = x.shape
    d = w.shape[1]
    return pl.pallas_call(
        _linear_kernel,
        out_shape=jax.ShapeDtypeStruct((n, d), jnp.float32),
        grid_spec=pltpu.PrefetchScalarGridSpec(
            num_scalar_prefetch=0,
            grid=(n // tile_m,),
            in_specs=[
                pl.BlockSpec((tile_m, f), lambda i: (i, 0)),
                pl.BlockSpec((f, d), lambda i: (0, 0)),
                pl.BlockSpec((1, d), lambda i: (0, 0)),
            ],
            out_specs=pl.BlockSpec((tile_m, d), lambda i: (i, 0)),
        ),
        compiler_params=pltpu.CompilerParams(
            dimension_semantics=("parallel",),
            vmem_limit_bytes=48 * 1024 * 1024,
        ),
    )(x, w, b)


def gcn_layer(adj_t_bf16, h, out_scale, in_scale, acc_in, *, tile_m, tile_k):
    """One fused UUGCN layer. Returns (normalized_layer_out, acc_in + out)."""
    n_dst, n_src = adj_t_bf16.shape
    d = h.shape[1]
    grid = (n_dst // tile_m, n_src // tile_k)
    return pl.pallas_call(
        _gcn_layer_kernel,
        out_shape=(
            jax.ShapeDtypeStruct((n_dst, d), jnp.float32),
            jax.ShapeDtypeStruct((n_dst, d), jnp.float32),
        ),
        grid_spec=pltpu.PrefetchScalarGridSpec(
            num_scalar_prefetch=0,
            grid=grid,
            in_specs=[
                pl.BlockSpec((tile_m, tile_k), lambda i, k: (i, k)),  # adj^T
                pl.BlockSpec((tile_k, d), lambda i, k: (k, 0)),       # h (src)
                pl.BlockSpec((tile_k, 1), lambda i, k: (k, 0)),       # out_scale
                pl.BlockSpec((tile_m, 1), lambda i, k: (i, 0)),       # in_scale
                pl.BlockSpec((tile_m, d), lambda i, k: (i, 0)),       # acc_in
            ],
            out_specs=(
                pl.BlockSpec((tile_m, d), lambda i, k: (i, 0)),       # layer out
                pl.BlockSpec((tile_m, d), lambda i, k: (i, 0)),       # acc out
            ),
            scratch_shapes=[pltpu.VMEM((tile_m, d), jnp.float32)],
        ),
        compiler_params=pltpu.CompilerParams(
            dimension_semantics=("parallel", "arbitrary"),
            vmem_limit_bytes=48 * 1024 * 1024,
        ),
    )(adj_t_bf16, h, out_scale, in_scale, acc_in)


def hgdm_forward(he_adjs, features, params, *, uugcn_layer=2, gcn_layer_n=2):
    """Pallas equivalent of HGDM.forward."""
    n, f = features.shape
    d = params["w_transform"].shape[1]

    # Lane-dense / tile-aligned padding.
    tile = _choose_tile(n)
    n_pad = _round_up(n, tile)
    d_pad = _round_up(d, 128)
    f_pad = _round_up(f, 128)

    x_p = _pad2(features.astype(jnp.float32), n_pad, f_pad)
    w_p = _pad2(params["w_transform"].astype(jnp.float32), f_pad, d_pad)
    b_p = jnp.pad(params["b_transform"].astype(jnp.float32),
                  (0, d_pad - d)).reshape(1, d_pad)

    embed = linear_transform(x_p, w_p, b_p, tile_m=tile)

    def prep_adj(adj):
        adj_p = _pad2(adj.astype(jnp.float32), n_pad, n_pad)
        # Degree scalers depend only on adj: compute once per adjacency.
        out_scale = lax.rsqrt(
            jnp.maximum(jnp.sum(adj_p, axis=1, keepdims=True), 1.0))     # (N,1)
        in_scale = lax.rsqrt(
            jnp.maximum(jnp.sum(adj_p, axis=0), 1.0)).reshape(n_pad, 1)  # (N,1)
        # Transpose once so the kernel runs a plain (TM,TK)@(TK,D) MXU matmul.
        adj_t = jnp.transpose(adj_p).astype(jnp.bfloat16)                # (dst, src)
        return adj_t, out_scale, in_scale

    def stack(adj, n_layers):
        adj_t, os_, is_ = prep_adj(adj)
        cur = embed
        acc = embed
        for _ in range(n_layers):
            cur, acc = gcn_layer(adj_t, cur, os_, is_, acc,
                                 tile_m=tile, tile_k=tile)
        return acc[:n, :d]

    target_embedding = stack(he_adjs[0], uugcn_layer)
    source_embeddings1 = stack(he_adjs[1], gcn_layer_n)
    source_embeddings2 = stack(he_adjs[2], gcn_layer_n)
    return source_embeddings1, source_embeddings2, target_embedding


# --------------------------- pure-JAX reference -----------------------------

def _reference_forward(he_adjs, features, params, uugcn_layer, gcn_layer_n):
    hi = lax.Precision.HIGHEST
    embed = jnp.dot(features, params["w_transform"], precision=hi) + params["b_transform"]

    def stack(adj, n_layers):
        cur = embed
        acc = embed
        for _ in range(n_layers):
            out_deg = jnp.maximum(adj.sum(axis=1), 1.0)
            node_f = cur * (out_deg ** -0.5)[:, None]
            rst = jnp.dot(adj.T, node_f, precision=hi)
            in_deg = jnp.maximum(adj.sum(axis=0), 1.0)
            rst = rst * (in_deg ** -0.5)[:, None]
            rst = jnp.where(rst >= 0, rst, 0.5 * rst)
            nrm = jnp.sqrt(jnp.sum(rst * rst, axis=1, keepdims=True))
            cur = rst / jnp.maximum(nrm, 1e-12)
            acc = acc + cur
        return acc

    return (stack(he_adjs[1], gcn_layer_n),
            stack(he_adjs[2], gcn_layer_n),
            stack(he_adjs[0], uugcn_layer))


# ------------------------------ main ----------------------------------------

if __name__ == "__main__":
    # Small, forward-consistent shapes.
    N = 64        # number of graph nodes
    F_DIM = 48    # raw feature dim (f_dim)
    LATDIM = 32   # args.latdim
    UUGCN_LAYER = 2
    GCN_LAYER = 2

    key = jax.random.PRNGKey(0)
    k_feat, k_w, k_b, k_a0, k_a1, k_a2 = jax.random.split(key, 6)

    features = jax.random.normal(k_feat, (N, F_DIM), dtype=jnp.float32)

    # transform_layer: xavier_normal_(gain=1.414) on a (latdim, f_dim) torch
    # weight; we store its transpose (F, D).
    xavier_std = 1.414 * (2.0 / (F_DIM + LATDIM)) ** 0.5
    w_transform = xavier_std * jax.random.normal(k_w, (F_DIM, LATDIM), jnp.float32)
    b_transform = 0.01 * jax.random.normal(k_b, (LATDIM,), jnp.float32)
    params = {"w_transform": w_transform, "b_transform": b_transform}

    # Three dense random adjacency matrices (adj[src, dst] in {0,1}).
    def rand_adj(k):
        return jax.random.bernoulli(k, 0.1, (N, N)).astype(jnp.float32)

    he_adjs = [rand_adj(k_a0), rand_adj(k_a1), rand_adj(k_a2)]

    fwd = jax.jit(functools.partial(
        hgdm_forward, uugcn_layer=UUGCN_LAYER, gcn_layer_n=GCN_LAYER))
    src1, src2, tgt = fwd(he_adjs, features, params)
    jax.block_until_ready((src1, src2, tgt))

    assert src1.shape == (N, LATDIM)
    assert src2.shape == (N, LATDIM)
    assert tgt.shape == (N, LATDIM)
    assert bool(jnp.all(jnp.isfinite(src1)))
    assert bool(jnp.all(jnp.isfinite(src2)))
    assert bool(jnp.all(jnp.isfinite(tgt)))

    ref1, ref2, reft = _reference_forward(
        he_adjs, features, params, UUGCN_LAYER, GCN_LAYER)
    for got, ref in ((src1, ref1), (src2, ref2), (tgt, reft)):
        err = float(jnp.max(jnp.abs(got - ref)))
        assert err < 2e-3, f"mismatch vs reference: {err}"

    print("KERNEL_OK")
</pallas_src>

<mosaic_0001>
module attributes {stable_mosaic.version = 11 : i64} {
  func.func @_gcn_layer_kernel(%arg0: i32, %arg1: i32, %arg2: memref<128x128xbf16, #tpu.memory_space<vmem>>, %arg3: memref<128x128xf32, #tpu.memory_space<vmem>>, %arg4: memref<128x1xf32, #tpu.memory_space<vmem>>, %arg5: memref<128x1xf32, #tpu.memory_space<vmem>>, %arg6: memref<128x128xf32, #tpu.memory_space<vmem>>, %arg7: memref<128x128xf32, #tpu.memory_space<vmem>>, %arg8: memref<128x128xf32, #tpu.memory_space<vmem>>, %arg9: memref<128x128xf32, #tpu.memory_space<vmem>>) attributes {dimension_semantics = [#tpu.dimension_semantics<parallel>, #tpu.dimension_semantics<arbitrary>], iteration_bounds = array<i64: 1, 1>, scalar_prefetch = 0 : i64, scratch_operands = 1 : i64, tpu.core_type = #tpu.core_type<tc>, window_params = [{transform_indices = @transform_0, window_bounds = array<i64: 128, 128>}, {transform_indices = @transform_1, window_bounds = array<i64: 128, 128>}, {transform_indices = @transform_2, window_bounds = array<i64: 128, 1>}, {transform_indices = @transform_3, window_bounds = array<i64: 128, 1>}, {transform_indices = @transform_4, window_bounds = array<i64: 128, 128>}, {transform_indices = @transform_5, window_bounds = array<i64: 128, 128>}, {transform_indices = @transform_6, window_bounds = array<i64: 128, 128>}]} {
    %c0_i32 = arith.constant 0 : i32
    %0 = arith.cmpi eq, %arg1, %c0_i32 : i32
    %1 = arith.extui %0 : i1 to i32
    %c0_i32_0 = arith.constant 0 : i32
    %2 = arith.cmpi ne, %1, %c0_i32_0 : i32
    scf.if %2 {
      %cst_12 = arith.constant 0.000000e+00 : f32
      %16 = vector.broadcast %cst_12 : f32 to vector<128x128xf32>
      %c0_13 = arith.constant 0 : index
      %c0_14 = arith.constant 0 : index
      %17 = vector.load %arg9[%c0_13, %c0_14] : memref<128x128xf32, #tpu.memory_space<vmem>>, vector<128x128xf32>
      tpu.vector_store %arg9[%c0_13, %c0_14], %16 {strides = array<i32>} : memref<128x128xf32, #tpu.memory_space<vmem>>, vector<128x128xf32>,
    } else {
    }
    %c0 = arith.constant 0 : index
    %c0_1 = arith.constant 0 : index
    %3 = vector.load %arg3[%c0, %c0_1] : memref<128x128xf32, #tpu.memory_space<vmem>>, vector<128x128xf32>
    %c0_2 = arith.constant 0 : index
    %c0_3 = arith.constant 0 : index
    %4 = vector.load %arg4[%c0_2, %c0_3] : memref<128x1xf32, #tpu.memory_space<vmem>>, vector<128x1xf32>
    %5 = vector.broadcast %4 : vector<128x1xf32> to vector<128x128xf32>
    %6 = arith.mulf %3, %5 : vector<128x128xf32>
    %c0_4 = arith.constant 0 : index
    %c0_5 = arith.constant 0 : index
    %7 = vector.load %arg2[%c0_4, %c0_5] : memref<128x128xbf16, #tpu.memory_space<vmem>>, vector<128x128xbf16>
    %8 = arith.extf %7 : vector<128x128xbf16> to vector<128x128xf32>
    %c0_6 = arith.constant 0 : index
    %c0_7 = arith.constant 0 : index
    %9 = vector.load %arg9[%c0_6, %c0_7] : memref<128x128xf32, #tpu.memory_space<vmem>>, vector<128x128xf32>
    %cst = arith.constant dense<0.000000e+00> : vector<128x128xf32>
    %10 = tpu.matmul %8, %6, %cst {dimension_numbers = #tpu.dot_dimension_numbers<[1], [0], [0], [1], [0, 0, 1, 1], [], []>} : vector<128x128xf32>, vector<128x128xf32>, vector<128x128xf32> -> vector<128x128xf32>
    %11 = arith.addf %9, %10 : vector<128x128xf32>
    %c0_8 = arith.constant 0 : index
    %c0_9 = arith.constant 0 : index
    %12 = vector.load %arg9[%c0_8, %c0_9] : memref<128x128xf32, #tpu.memory_space<vmem>>, vector<128x128xf32>
    tpu.vector_store %arg9[%c0_8, %c0_9], %11 {strides = array<i32>} : memref<128x128xf32, #tpu.memory_space<vmem>>, vector<128x128xf32>,
    %c0_i32_10 = arith.constant 0 : i32
    %13 = arith.cmpi eq, %arg1, %c0_i32_10 : i32
    %14 = arith.extui %13 : i1 to i32
    %c0_i32_11 = arith.constant 0 : i32
    %15 = arith.cmpi ne, %14, %c0_i32_11 : i32
    scf.if %15 {
      %c0_12 = arith.constant 0 : index
      %c0_13 = arith.constant 0 : index
      %16 = vector.load %arg9[%c0_12, %c0_13] : memref<128x128xf32, #tpu.memory_space<vmem>>, vector<128x128xf32>
      %c0_14 = arith.constant 0 : index
      %c0_15 = arith.constant 0 : index
      %17 = vector.load %arg5[%c0_14, %c0_15] : memref<128x1xf32, #tpu.memory_space<vmem>>, vector<128x1xf32>
      %18 = vector.broadcast %17 : vector<128x1xf32> to vector<128x128xf32>
      %19 = arith.mulf %16, %18 : vector<128x128xf32>
      %cst_16 = arith.constant 0.000000e+00 : f32
      %20 = vector.broadcast %cst_16 : f32 to vector<128x128xf32>
      %21 = arith.cmpf oge, %19, %20 : vector<128x128xf32>
      %cst_17 = arith.constant 5.000000e-01 : f32
      %22 = vector.broadcast %cst_17 : f32 to vector<128x128xf32>
      %23 = arith.mulf %22, %19 : vector<128x128xf32>
      %24 = arith.select %21, %19, %23 : vector<128x128xi1>, vector<128x128xf32>
      %25 = arith.mulf %24, %24 : vector<128x128xf32>
      %cst_18 = arith.constant dense<0.000000e+00> : vector<128xf32>
      %26 = vector.multi_reduction <add>, %25, %cst_18 [1] : vector<128x128xf32> to vector<128xf32>
      %27 = vector.shape_cast %26 : vector<128xf32> to vector<128x1xf32>
      %28 = math.sqrt %27 : vector<128x1xf32>
      %cst_19 = arith.constant 9.99999996E-13 : f32
      %29 = vector.broadcast %cst_19 : f32 to vector<128x1xf32>
      %30 = arith.maximumf %28, %29 : vector<128x1xf32>
      %31 = vector.broadcast %30 : vector<128x1xf32> to vector<128x128xf32>
      %32 = arith.divf %24, %31 : vector<128x128xf32>
      %c0_20 = arith.constant 0 : index
      %c0_21 = arith.constant 0 : index
      %33 = vector.load %arg7[%c0_20, %c0_21] : memref<128x128xf32, #tpu.memory_space<vmem>>, vector<128x128xf32>
      tpu.vector_store %arg7[%c0_20, %c0_21], %32 {strides = array<i32>} : memref<128x128xf32, #tpu.memory_space<vmem>>, vector<128x128xf32>,
      %c0_22 = arith.constant 0 : index
      %c0_23 = arith.constant 0 : index
      %34 = vector.load %arg6[%c0_22, %c0_23] : memref<128x128xf32, #tpu.memory_space<vmem>>, vector<128x128xf32>
      %35 = arith.addf %34, %32 : vector<128x128xf32>
      %c0_24 = arith.constant 0 : index
      %c0_25 = arith.constant 0 : index
      %36 = vector.load %arg8[%c0_24, %c0_25] : memref<128x128xf32, #tpu.memory_space<vmem>>, vector<128x128xf32>
      tpu.vector_store %arg8[%c0_24, %c0_25], %35 {strides = array<i32>} : memref<128x128xf32, #tpu.memory_space<vmem>>, vector<128x128xf32>,
    } else {
    }
    return
  }
  func.func @transform_0(%arg0: i32, %arg1: i32) -> (i32, i32) {
    %c0_i32 = arith.constant 0 : i32
    return %arg0, %arg1 : i32, i32
  }
  func.func @transform_1(%arg0: i32, %arg1: i32) -> (i32, i32) {
    %c0_i32 = arith.constant 0 : i32
    %c0_i32_0 = arith.constant 0 : i32
    return %arg1, %c0_i32 : i32, i32
  }
  func.func @transform_2(%arg0: i32, %arg1: i32) -> (i32, i32) {
    %c0_i32 = arith.constant 0 : i32
    %c0_i32_0 = arith.constant 0 : i32
    return %arg1, %c0_i32 : i32, i32
  }
  func.func @transform_3(%arg0: i32, %arg1: i32) -> (i32, i32) {
    %c0_i32 = arith.constant 0 : i32
    %c0_i32_0 = arith.constant 0 : i32
    return %arg0, %c0_i32 : i32, i32
  }
  func.func @transform_4(%arg0: i32, %arg1: i32) -> (i32, i32) {
    %c0_i32 = arith.constant 0 : i32
    %c0_i32_0 = arith.constant 0 : i32
    return %arg0, %c0_i32 : i32, i32
  }
  func.func @transform_5(%arg0: i32, %arg1: i32) -> (i32, i32) {
    %c0_i32 = arith.constant 0 : i32
    %c0_i32_0 = arith.constant 0 : i32
    return %arg0, %c0_i32 : i32, i32
  }
  func.func @transform_6(%arg0: i32, %arg1: i32) -> (i32, i32) {
    %c0_i32 = arith.constant 0 : i32
    %c0_i32_0 = arith.constant 0 : i32
    return %arg0, %c0_i32 : i32, i32
  }
}

module attributes {stable_mosaic.version = 11 : i64} {
  func.func @_gcn_layer_kernel(%arg0: i32, %arg1: i32, %arg2: memref<128x128xbf16, #tpu.memory_space<vmem>>, %arg3: memref<128x128xf32, #tpu.memory_space<vmem>>, %arg4: memref<128x1xf32, #tpu.memory_space<vmem>>, %arg5: memref<128x1xf32, #tpu.memory_space<vmem>>, %arg6: memref<128x128xf32, #tpu.memory_space<vmem>>, %arg7: memref<128x128xf32, #tpu.memory_space<vmem>>, %arg8: memref<128x128xf32, #tpu.memory_space<vmem>>, %arg9: memref<128x128xf32, #tpu.memory_space<vmem>>) attributes {dimension_semantics = [#tpu.dimension_semantics<parallel>, #tpu.dimension_semantics<arbitrary>], iteration_bounds = array<i64: 1, 1>, scalar_prefetch = 0 : i64, scratch_operands = 1 : i64, tpu.core_type = #tpu.core_type<tc>, window_params = [{transform_indices = @transform_0, window_bounds = array<i64: 128, 128>}, {transform_indices = @transform_1, window_bounds = array<i64: 128, 128>}, {transform_indices = @transform_2, window_bounds = array<i64: 128, 1>}, {transform_indices = @transform_3, window_bounds = array<i64: 128, 1>}, {transform_indices = @transform_4, window_bounds = array<i64: 128, 128>}, {transform_indices = @transform_5, window_bounds = array<i64: 128, 128>}, {transform_indices = @transform_6, window_bounds = array<i64: 128, 128>}]} {
    %c0_i32 = arith.constant 0 : i32
    %0 = arith.cmpi eq, %arg1, %c0_i32 : i32
    %1 = arith.extui %0 : i1 to i32
    %c0_i32_0 = arith.constant 0 : i32
    %2 = arith.cmpi ne, %1, %c0_i32_0 : i32
    scf.if %2 {
      %cst_12 = arith.constant 0.000000e+00 : f32
      %16 = vector.broadcast %cst_12 : f32 to vector<128x128xf32>
      %c0_13 = arith.constant 0 : index
      %c0_14 = arith.constant 0 : index
      %17 = vector.load %arg9[%c0_13, %c0_14] : memref<128x128xf32, #tpu.memory_space<vmem>>, vector<128x128xf32>
      tpu.vector_store %arg9[%c0_13, %c0_14], %16 {strides = array<i32>} : memref<128x128xf32, #tpu.memory_space<vmem>>, vector<128x128xf32>,
    } else {
    }
    %c0 = arith.constant 0 : index
    %c0_1 = arith.constant 0 : index
    %3 = vector.load %arg3[%c0, %c0_1] : memref<128x128xf32, #tpu.memory_space<vmem>>, vector<128x128xf32>
    %c0_2 = arith.constant 0 : index
    %c0_3 = arith.constant 0 : index
    %4 = vector.load %arg4[%c0_2, %c0_3] : memref<128x1xf32, #tpu.memory_space<vmem>>, vector<128x1xf32>
    %5 = vector.broadcast %4 : vector<128x1xf32> to vector<128x128xf32>
    %6 = arith.mulf %3, %5 : vector<128x128xf32>
    %c0_4 = arith.constant 0 : index
    %c0_5 = arith.constant 0 : index
    %7 = vector.load %arg2[%c0_4, %c0_5] : memref<128x128xbf16, #tpu.memory_space<vmem>>, vector<128x128xbf16>
    %8 = arith.extf %7 : vector<128x128xbf16> to vector<128x128xf32>
    %c0_6 = arith.constant 0 : index
    %c0_7 = arith.constant 0 : index
    %9 = vector.load %arg9[%c0_6, %c0_7] : memref<128x128xf32, #tpu.memory_space<vmem>>, vector<128x128xf32>
    %cst = arith.constant dense<0.000000e+00> : vector<128x128xf32>
    %10 = tpu.matmul %8, %6, %cst {dimension_numbers = #tpu.dot_dimension_numbers<[1], [0], [0], [1], [0, 0, 1, 1], [], []>} : vector<128x128xf32>, vector<128x128xf32>, vector<128x128xf32> -> vector<128x128xf32>
    %11 = arith.addf %9, %10 : vector<128x128xf32>
    %c0_8 = arith.constant 0 : index
    %c0_9 = arith.constant 0 : index
    %12 = vector.load %arg9[%c0_8, %c0_9] : memref<128x128xf32, #tpu.memory_space<vmem>>, vector<128x128xf32>
    tpu.vector_store %arg9[%c0_8, %c0_9], %11 {strides = array<i32>} : memref<128x128xf32, #tpu.memory_space<vmem>>, vector<128x128xf32>,
    %c0_i32_10 = arith.constant 0 : i32
    %13 = arith.cmpi eq, %arg1, %c0_i32_10 : i32
    %14 = arith.extui %13 : i1 to i32
    %c0_i32_11 = arith.constant 0 : i32
    %15 = arith.cmpi ne, %14, %c0_i32_11 : i32
    scf.if %15 {
      %c0_12 = arith.constant 0 : index
      %c0_13 = arith.constant 0 : index
      %16 = vector.load %arg9[%c0_12, %c0_13] : memref<128x128xf32, #tpu.memory_space<vmem>>, vector<128x128xf32>
      %c0_14 = arith.constant 0 : index
      %c0_15 = arith.constant 0 : index
      %17 = vector.load %arg5[%c0_14, %c0_15] : memref<128x1xf32, #tpu.memory_space<vmem>>, vector<128x1xf32>
      %18 = vector.broadcast %17 : vector<128x1xf32> to vector<128x128xf32>
      %19 = arith.mulf %16, %18 : vector<128x128xf32>
      %cst_16 = arith.constant 0.000000e+00 : f32
      %20 = vector.broadcast %cst_16 : f32 to vector<128x128xf32>
      %21 = arith.cmpf oge, %19, %20 : vector<128x128xf32>
      %cst_17 = arith.constant 5.000000e-01 : f32
      %22 = vector.broadcast %cst_17 : f32 to vector<128x128xf32>
      %23 = arith.mulf %22, %19 : vector<128x128xf32>
      %24 = arith.select %21, %19, %23 : vector<128x128xi1>, vector<128x128xf32>
      %25 = arith.mulf %24, %24 : vector<128x128xf32>
      %cst_18 = arith.constant dense<0.000000e+00> : vector<128xf32>
      %26 = vector.multi_reduction <add>, %25, %cst_18 [1] : vector<128x128xf32> to vector<128xf32>
      %27 = vector.shape_cast %26 : vector<128xf32> to vector<128x1xf32>
      %28 = math.sqrt %27 : vector<128x1xf32>
      %cst_19 = arith.constant 9.99999996E-13 : f32
      %29 = vector.broadcast %cst_19 : f32 to vector<128x1xf32>
      %30 = arith.maximumf %28, %29 : vector<128x1xf32>
      %31 = vector.broadcast %30 : vector<128x1xf32> to vector<128x128xf32>
      %32 = arith.divf %24, %31 : vector<128x128xf32>
      %c0_20 = arith.constant 0 : index
      %c0_21 = arith.constant 0 : index
      %33 = vector.load %arg7[%c0_20, %c0_21] : memref<128x128xf32, #tpu.memory_space<vmem>>, vector<128x128xf32>
      tpu.vector_store %arg7[%c0_20, %c0_21], %32 {strides = array<i32>} : memref<128x128xf32, #tpu.memory_space<vmem>>, vector<128x128xf32>,
      %c0_22 = arith.constant 0 : index
      %c0_23 = arith.constant 0 : index
      %34 = vector.load %arg6[%c0_22, %c0_23] : memref<128x128xf32, #tpu.memory_space<vmem>>, vector<128x128xf32>
      %35 = arith.addf %34, %32 : vector<128x128xf32>
      %c0_24 = arith.constant 0 : index
      %c0_25 = arith.constant 0 : index
      %36 = vector.load %arg8[%c0_24, %c0_25] : memref<128x128xf32, #tpu.memory_space<vmem>>, vector<128x128xf32>
      tpu.vector_store %arg8[%c0_24, %c0_25], %35 {strides = array<i32>} : memref<128x128xf32, #tpu.memory_space<vmem>>, vector<128x128xf32>,
    } else {
    }
    return
  }
  func.func @transform_0(%arg0: i32, %arg1: i32) -> (i32, i32) {
    %c0_i32 = arith.constant 0 : i32
    return %arg0, %arg1 : i32, i32
  }
  func.func @transform_1(%arg0: i32, %arg1: i32) -> (i32, i32) {
    %c0_i32 = arith.constant 0 : i32
    %c0_i32_0 = arith.constant 0 : i32
    return %arg1, %c0_i32 : i32, i32
  }
  func.func @transform_2(%arg0: i32, %arg1: i32) -> (i32, i32) {
    %c0_i32 = arith.constant 0 : i32
    %c0_i32_0 = arith.constant 0 : i32
    return %arg1, %c0_i32 : i32, i32
  }
  func.func @transform_3(%arg0: i32, %arg1: i32) -> (i32, i32) {
    %c0_i32 = arith.constant 0 : i32
    %c0_i32_0 = arith.constant 0 : i32
    return %arg0, %c0_i32 : i32, i32
  }
  func.func @transform_4(%arg0: i32, %arg1: i32) -> (i32, i32) {
    %c0_i32 = arith.constant 0 : i32
    %c0_i32_0 = arith.constant 0 : i32
    return %arg0, %c0_i32 : i32, i32
  }
  func.func @transform_5(%arg0: i32, %arg1: i32) -> (i32, i32) {
    %c0_i32 = arith.constant 0 : i32
    %c0_i32_0 = arith.constant 0 : i32
    return %arg0, %c0_i32 : i32, i32
  }
  func.func @transform_6(%arg0: i32, %arg1: i32) -> (i32, i32) {
    %c0_i32 = arith.constant 0 : i32
    %c0_i32_0 = arith.constant 0 : i32
    return %arg0, %c0_i32 : i32, i32
  }
}

module attributes {stable_mosaic.version = 11 : i64} {
  func.func @_linear_kernel(%arg0: i32, %arg1: memref<128x128xf32, #tpu.memory_space<vmem>>, %arg2: memref<128x128xf32, #tpu.memory_space<vmem>>, %arg3: memref<1x128xf32, #tpu.memory_space<vmem>>, %arg4: memref<128x128xf32, #tpu.memory_space<vmem>>) attributes {dimension_semantics = [#tpu.dimension_semantics<parallel>], iteration_bounds = array<i64: 1>, scalar_prefetch = 0 : i64, scratch_operands = 0 : i64, tpu.core_type = #tpu.core_type<tc>, window_params = [{transform_indices = @transform_0, window_bounds = array<i64: 128, 128>}, {pipeline_mode = #tpu.pipeline_mode<synchronous>, transform_indices = @transform_1, window_bounds = array<i64: 128, 128>}, {pipeline_mode = #tpu.pipeline_mode<synchronous>, transform_indices = @transform_2, window_bounds = array<i64: 1, 128>}, {transform_indices = @transform_3, window_bounds = array<i64: 128, 128>}]} {
    %c0 = arith.constant 0 : index
    %c0_0 = arith.constant 0 : index
    %0 = vector.load %arg1[%c0, %c0_0] : memref<128x128xf32, #tpu.memory_space<vmem>>, vector<128x128xf32>
    %c0_1 = arith.constant 0 : index
    %c0_2 = arith.constant 0 : index
    %1 = vector.load %arg2[%c0_1, %c0_2] : memref<128x128xf32, #tpu.memory_space<vmem>>, vector<128x128xf32>
    %cst = arith.constant dense<0.000000e+00> : vector<128x128xf32>
    %2 = tpu.matmul %0, %1, %cst {dimension_numbers = #tpu.dot_dimension_numbers<[1], [0], [0], [1], [0, 0, 1, 1], [], []>} : vector<128x128xf32>, vector<128x128xf32>, vector<128x128xf32> -> vector<128x128xf32>
    %c0_3 = arith.constant 0 : index
    %c0_4 = arith.constant 0 : index
    %3 = vector.load %arg3[%c0_3, %c0_4] : memref<1x128xf32, #tpu.memory_space<vmem>>, vector<1x128xf32>
    %4 = vector.broadcast %3 : vector<1x128xf32> to vector<128x128xf32>
    %5 = arith.addf %2, %4 : vector<128x128xf32>
    %c0_5 = arith.constant 0 : index
    %c0_6 = arith.constant 0 : index
    %6 = vector.load %arg4[%c0_5, %c0_6] : memref<128x128xf32, #tpu.memory_space<vmem>>, vector<128x128xf32>
    tpu.vector_store %arg4[%c0_5, %c0_6], %5 {strides = array<i32>} : memref<128x128xf32, #tpu.memory_space<vmem>>, vector<128x128xf32>,
    return
  }
  func.func @transform_0(%arg0: i32) -> (i32, i32) {
    %c0_i32 = arith.constant 0 : i32
    %c0_i32_0 = arith.constant 0 : i32
    return %arg0, %c0_i32 : i32, i32
  }
  func.func @transform_1(%arg0: i32) -> (i32, i32) {
    %c0_i32 = arith.constant 0 : i32
    %c0_i32_0 = arith.constant 0 : i32
    %c0_i32_1 = arith.constant 0 : i32
    return %c0_i32, %c0_i32_0 : i32, i32
  }
  func.func @transform_2(%arg0: i32) -> (i32, i32) {
    %c0_i32 = arith.constant 0 : i32
    %c0_i32_0 = arith.constant 0 : i32
    %c0_i32_1 = arith.constant 0 : i32
    return %c0_i32, %c0_i32_0 : i32, i32
  }
  func.func @transform_3(%arg0: i32) -> (i32, i32) {
    %c0_i32 = arith.constant 0 : i32
    %c0_i32_0 = arith.constant 0 : i32
    return %arg0, %c0_i32 : i32, i32
  }
}

</mosaic_0001>

<llo_original>
// kernel: hgdm_forward.7
$region0: #{hgdm_forward.7}
  #allocation0 [shape = 'u32[]', space=smem, size = 0x4, offset = 0x4, fixed_abs, tag = 'smem constant byte address 0x4 - core index']
  #allocation1 [shape = 'u32[72,128]{1,0:T(1,128)}', space=vmem, size = 0x9000, scoped, tag = 'internal scratch']
  %s0 = inlined_call_operand.vmem [shape: f32[128,128], index: 0, kind: input, shape index: {}]
  %s1 = inlined_call_operand.vmem [shape: f32[128,128], index: 1, kind: input, shape index: {}]
  %s2 = inlined_call_operand.vmem [shape: f32[1,128], index: 2, kind: input, shape index: {}]
  %s3 = inlined_call_operand.vmem [shape: f32[128,128], index: 3, kind: output, shape index: {}]
  %s4 = sld [smem:[#allocation0]]
  $region22: #{hgdm_forward.7} parent=0
    _
  %s6 = ssub.s32 1, %s4
  %s7 = scalar_select 0, %s6, %s4
  // Predicated region
  $region2: #{hgdm_forward.7} parent=0 // pred_check
    _
  $region3: #{hgdm_forward.7} parent=0 // pred_check_branch
    %9 = sbr.rel (0) target = $region5
  $region4: #{hgdm_forward.7} parent=0 // pred_region
    _
  $region5: #{hgdm_forward.7} parent=0 // pred_fallthru
    _
  // Predicated region
  $region6: #{hgdm_forward.7} parent=0 // pred_check
    _
  $region7: #{hgdm_forward.7} parent=0 // pred_check_branch
    %11 = sbr.rel (0) target = $region9
  $region8: #{hgdm_forward.7} parent=0 // pred_region
    _
  $region9: #{hgdm_forward.7} parent=0 // pred_fallthru
    _
  // Predicated region
  $region10: #{hgdm_forward.7} parent=0 // pred_check
    _
  $region11: #{hgdm_forward.7} parent=0 // pred_check_branch
    %13 = sbr.rel (0) target = $region13
  $region12: #{hgdm_forward.7} parent=0 // pred_region
    _
  $region13: #{hgdm_forward.7} parent=0 // pred_fallthru
    _
  %v14 = vld [vmem:[%s0] sm:$0xff]
  %v15 = vld [vmem:[%s0 + $0x8] sm:$0xff]
  %v16 = vld [vmem:[%s0 + $0x10] sm:$0xff]
  %v17 = vld [vmem:[%s0 + $0x18] sm:$0xff]
  %v18 = vld [vmem:[%s0 + $0x20] sm:$0xff]
  %v19 = vld [vmem:[%s0 + $0x28] sm:$0xff]
  %v20 = vld [vmem:[%s0 + $0x30] sm:$0xff]
  %v21 = vld [vmem:[%s0 + $0x38] sm:$0xff]
  %v22 = vld [vmem:[%s0 + $0x40] sm:$0xff]
  %v23 = vld [vmem:[%s0 + $0x48] sm:$0xff]
  %v24 = vld [vmem:[%s0 + $0x50] sm:$0xff]
  %v25 = vld [vmem:[%s0 + $0x58] sm:$0xff]
  %v26 = vld [vmem:[%s0 + $0x60] sm:$0xff]
  %v27 = vld [vmem:[%s0 + $0x68] sm:$0xff]
  %v28 = vld [vmem:[%s0 + $0x70] sm:$0xff]
  %v29 = vld [vmem:[%s0 + $0x78] sm:$0xff]
  %v30 = vld [vmem:[%s1] sm:$0xff]
  %v31 = vld [vmem:[%s1 + $0x8] sm:$0xff]
  %v32 = vld [vmem:[%s1 + $0x10] sm:$0xff]
  %v33 = vld [vmem:[%s1 + $0x18] sm:$0xff]
  %v34 = vld [vmem:[%s1 + $0x20] sm:$0xff]
  %v35 = vld [vmem:[%s1 + $0x28] sm:$0xff]
  %v36 = vld [vmem:[%s1 + $0x30] sm:$0xff]
  %v37 = vld [vmem:[%s1 + $0x38] sm:$0xff]
  %v38 = vld [vmem:[%s1 + $0x40] sm:$0xff]
  %v39 = vld [vmem:[%s1 + $0x48] sm:$0xff]
  %v40 = vld [vmem:[%s1 + $0x50] sm:$0xff]
  %v41 = vld [vmem:[%s1 + $0x58] sm:$0xff]
  %v42 = vld [vmem:[%s1 + $0x60] sm:$0xff]
  %v43 = vld [vmem:[%s1 + $0x68] sm:$0xff]
  %v44 = vld [vmem:[%s1 + $0x70] sm:$0xff]
  %v45 = vld [vmem:[%s1 + $0x78] sm:$0xff]
  %v46 = vld [vmem:[%s2] sm:$0x1]
  %v48 = vperm.slane %v46, 0
  %50 = vmatpush.msra.mxu0 %v45
  %51 = vmatpush.msra.mxu0 %v44
  %52 = vmatpush.msra.mxu0 %v43
  %53 = vmatpush.msra.mxu0 %v42
  %54 = vmatpush.msra.mxu0 %v41
  %55 = vmatpush.msra.mxu0 %v40
  %56 = vmatpush.msra.mxu0 %v39
  %57 = vmatpush.msra.mxu0 %v38
  %58 = vmatpush.msra.mxu0 %v37
  %59 = vmatpush.msra.mxu0 %v36
  %60 = vmatpush.msra.mxu0 %v35
  %61 = vmatpush.msra.mxu0 %v34
  %62 = vmatpush.msra.mxu0 %v33
  %63 = vmatpush.msra.mxu0 %v32
  %64 = vmatpush.msra.mxu0 %v31
  %65 = vmatpush.msra.mxu0 %v30
  %66 = vmatmul.f32.gmra.mxu0 %v14
  %v67 = vpop.f32.mrf.mxu0
  %v68 = vadd.f32 %v48, %v67
  %69 = vmatmul.f32.gmra.mxu0 %v15
  %v70 = vpop.f32.mrf.mxu0
  %v71 = vadd.f32 %v48, %v70
  %72 = vmatmul.f32.gmra.mxu0 %v16
  %v73 = vpop.f32.mrf.mxu0
  %v74 = vadd.f32 %v48, %v73
  %75 = vmatmul.f32.gmra.mxu0 %v17
  %v76 = vpop.f32.mrf.mxu0
  %v77 = vadd.f32 %v48, %v76
  %78 = vmatmul.f32.gmra.mxu0 %v18
  %v79 = vpop.f32.mrf.mxu0
  %v80 = vadd.f32 %v48, %v79
  %81 = vmatmul.f32.gmra.mxu0 %v19
  %v82 = vpop.f32.mrf.mxu0
  %v83 = vadd.f32 %v48, %v82
  %84 = vmatmul.f32.gmra.mxu0 %v20
  %v85 = vpop.f32.mrf.mxu0
  %v86 = vadd.f32 %v48, %v85
  %87 = vmatmul.f32.gmra.mxu0 %v21
  %v88 = vpop.f32.mrf.mxu0
  %v89 = vadd.f32 %v48, %v88
  %90 = vmatmul.f32.gmra.mxu0 %v22
  %v91 = vpop.f32.mrf.mxu0
  %v92 = vadd.f32 %v48, %v91
  %93 = vmatmul.f32.gmra.mxu0 %v23
  %v94 = vpop.f32.mrf.mxu0
  %v95 = vadd.f32 %v48, %v94
  %96 = vmatmul.f32.gmra.mxu0 %v24
  %v97 = vpop.f32.mrf.mxu0
  %v98 = vadd.f32 %v48, %v97
  %99 = vmatmul.f32.gmra.mxu0 %v25
  %v100 = vpop.f32.mrf.mxu0
  %v101 = vadd.f32 %v48, %v100
  %102 = vmatmul.f32.gmra.mxu0 %v26
  %v103 = vpop.f32.mrf.mxu0
  %v104 = vadd.f32 %v48, %v103
  %105 = vmatmul.f32.gmra.mxu0 %v27
  %v106 = vpop.f32.mrf.mxu0
  %v107 = vadd.f32 %v48, %v106
  %108 = vmatmul.f32.gmra.mxu0 %v28
  %v109 = vpop.f32.mrf.mxu0
  %v110 = vadd.f32 %v48, %v109
  %111 = vmatmul.f32.gmra.mxu0 %v29
  %v112 = vpop.f32.mrf.mxu0
  %v113 = vadd.f32 %v48, %v112
  %114 = vdwg.mxu0
  %115 = vst [vmem:[%s3] sm:$0xff] %v68
  %116 = vst [vmem:[%s3 + $0x8] sm:$0xff] %v71
  %117 = vst [vmem:[%s3 + $0x10] sm:$0xff] %v74
  %118 = vst [vmem:[%s3 + $0x18] sm:$0xff] %v77
  %119 = vst [vmem:[%s3 + $0x20] sm:$0xff] %v80
  %120 = vst [vmem:[%s3 + $0x28] sm:$0xff] %v83
  %121 = vst [vmem:[%s3 + $0x30] sm:$0xff] %v86
  %122 = vst [vmem:[%s3 + $0x38] sm:$0xff] %v89
  %123 = vst [vmem:[%s3 + $0x40] sm:$0xff] %v92
  %124 = vst [vmem:[%s3 + $0x48] sm:$0xff] %v95
  %125 = vst [vmem:[%s3 + $0x50] sm:$0xff] %v98
  %126 = vst [vmem:[%s3 + $0x58] sm:$0xff] %v101
  %127 = vst [vmem:[%s3 + $0x60] sm:$0xff] %v104
  %128 = vst [vmem:[%s3 + $0x68] sm:$0xff] %v107
  %129 = vst [vmem:[%s3 + $0x70] sm:$0xff] %v110
  %130 = vst [vmem:[%s3 + $0x78] sm:$0xff] %v113
  // Predicated region
  $region14: #{hgdm_forward.7} parent=0 // pred_check
    _
  $region15: #{hgdm_forward.7} parent=0 // pred_check_branch
    %132 = sbr.rel (0) target = $region17
  $region16: #{hgdm_forward.7} parent=0 // pred_region
    _
  $region17: #{hgdm_forward.7} parent=0 // pred_fallthru
    _
  // Predicated region
  $region18: #{hgdm_forward.7} parent=0 // pred_check
    _
  $region19: #{hgdm_forward.7} parent=0 // pred_check_branch
    %134 = sbr.rel (0) target = $region21
  $region20: #{hgdm_forward.7} parent=0 // pred_region
    _
  $region21: #{hgdm_forward.7} parent=0 // pred_fallthru
    _

// kernel: hgdm_forward.8
$region0: #{hgdm_forward.8}
  #allocation0 [shape = 'u32[]', space=smem, size = 0x4, offset = 0x4, fixed_abs, tag = 'smem constant byte address 0x4 - core index']
  #allocation1 [shape = 'u32[72,128]{1,0:T(1,128)}', space=vmem, size = 0x9000, scoped, tag = 'internal scratch']
  #allocation2 [shape = 'f32[128,128]{1,0:T(8,128)}', space=vmem, size = 0x10000, scoped, tag = 'scratch operand']
  %s0 = inlined_call_operand.vmem [shape: bf16[128,128], index: 0, kind: input, shape index: {}]
  %s1 = inlined_call_operand.vmem [shape: f32[128,128], index: 1, kind: input, shape index: {}, may-alias: {1,4}]
  %s2 = inlined_call_operand.vmem [shape: f32[128,1], index: 2, kind: input, shape index: {}]
  %s3 = inlined_call_operand.vmem [shape: f32[128,1], index: 3, kind: input, shape index: {}]
  %s4 = inlined_call_operand.vmem [shape: f32[128,128], index: 4, kind: input, shape index: {}, may-alias: {1,4}]
  %s5 = inlined_call_operand.vmem [shape: f32[128,128], index: 5, kind: output, shape index: {0}]
  %s6 = inlined_call_operand.vmem [shape: f32[128,128], index: 6, kind: output, shape index: {1}]
  %7 = xla_tuple %s5, %s6
  %s8 = sld [smem:[#allocation0]]
  $region46: #{hgdm_forward.8} parent=0
    _
  %s10 = ssub.s32 1, %s8
  %s11 = scalar_select 0, %s10, %s8
  // Predicated region
  $region2: #{hgdm_forward.8} parent=0 // pred_check
    _
  $region3: #{hgdm_forward.8} parent=0 // pred_check_branch
    %13 = sbr.rel (0) target = $region5
  $region4: #{hgdm_forward.8} parent=0 // pred_region
    _
  $region5: #{hgdm_forward.8} parent=0 // pred_fallthru
    _
  // Predicated region
  $region6: #{hgdm_forward.8} parent=0 // pred_check
    _
  $region7: #{hgdm_forward.8} parent=0 // pred_check_branch
    %15 = sbr.rel (0) target = $region9
  $region8: #{hgdm_forward.8} parent=0 // pred_region
    _
  $region9: #{hgdm_forward.8} parent=0 // pred_fallthru
    _
  // Predicated region
  $region10: #{hgdm_forward.8} parent=0 // pred_check
    _
  $region11: #{hgdm_forward.8} parent=0 // pred_check_branch
    %17 = sbr.rel (0) target = $region13
  $region12: #{hgdm_forward.8} parent=0 // pred_region
    _
  $region13: #{hgdm_forward.8} parent=0 // pred_fallthru
    _
  // Predicated region
  $region14: #{hgdm_forward.8} parent=0 // pred_check
    _
  $region15: #{hgdm_forward.8} parent=0 // pred_check_branch
    %19 = sbr.rel (0) target = $region17
  $region16: #{hgdm_forward.8} parent=0 // pred_region
    _
  $region17: #{hgdm_forward.8} parent=0 // pred_fallthru
    _
  // Predicated region
  $region18: #{hgdm_forward.8} parent=0 // pred_check
    _
  $region19: #{hgdm_forward.8} parent=0 // pred_check_branch
    %21 = sbr.rel (0) target = $region21
  $region20: #{hgdm_forward.8} parent=0 // pred_region
    _
  $region21: #{hgdm_forward.8} parent=0 // pred_fallthru
    _
  %p22 = scmp.eq.s32.totalorder 0, 0
  // Predicated region
  $region22: #{hgdm_forward.8} parent=0 // pred_check
    %p23 = pneg %p22
  $region23: #{hgdm_forward.8} parent=0 // pred_check_branch
    %25 = sbr.rel (%p23) target = $region25
  $region24: #{hgdm_forward.8} parent=0 // pred_region
    %26 = vst [vmem:[#allocation2] sm:$0xff] 0.0
    %27 = vst [vmem:[#allocation2 + $0x8] sm:$0xff] 0.0
    %28 = vst [vmem:[#allocation2 + $0x10] sm:$0xff] 0.0
    %29 = vst [vmem:[#allocation2 + $0x18] sm:$0xff] 0.0
    %30 = vst [vmem:[#allocation2 + $0x20] sm:$0xff] 0.0
    %31 = vst [vmem:[#allocation2 + $0x28] sm:$0xff] 0.0
    %32 = vst [vmem:[#allocation2 + $0x30] sm:$0xff] 0.0
    %33 = vst [vmem:[#allocation2 + $0x38] sm:$0xff] 0.0
    %34 = vst [vmem:[#allocation2 + $0x40] sm:$0xff] 0.0
    %35 = vst [vmem:[#allocation2 + $0x48] sm:$0xff] 0.0
    %36 = vst [vmem:[#allocation2 + $0x50] sm:$0xff] 0.0
    %37 = vst [vmem:[#allocation2 + $0x58] sm:$0xff] 0.0
    %38 = vst [vmem:[#allocation2 + $0x60] sm:$0xff] 0.0
    %39 = vst [vmem:[#allocation2 + $0x68] sm:$0xff] 0.0
    %40 = vst [vmem:[#allocation2 + $0x70] sm:$0xff] 0.0
    %41 = vst [vmem:[#allocation2 + $0x78] sm:$0xff] 0.0
  $region25: #{hgdm_forward.8} parent=0 // pred_fallthru
    _
  %v42 = vld [vmem:[%s1] sm:$0xff]
  %v43 = vld [vmem:[%s1 + $0x8] sm:$0xff]
  %v44 = vld [vmem:[%s1 + $0x10] sm:$0xff]
  %v45 = vld [vmem:[%s1 + $0x18] sm:$0xff]
  %v46 = vld [vmem:[%s1 + $0x20] sm:$0xff]
  %v47 = vld [vmem:[%s1 + $0x28] sm:$0xff]
  %v48 = vld [vmem:[%s1 + $0x30] sm:$0xff]
  %v49 = vld [vmem:[%s1 + $0x38] sm:$0xff]
  %v50 = vld [vmem:[%s1 + $0x40] sm:$0xff]
  %v51 = vld [vmem:[%s1 + $0x48] sm:$0xff]
  %v52 = vld [vmem:[%s1 + $0x50] sm:$0xff]
  %v53 = vld [vmem:[%s1 + $0x58] sm:$0xff]
  %v54 = vld [vmem:[%s1 + $0x60] sm:$0xff]
  %v55 = vld [vmem:[%s1 + $0x68] sm:$0xff]
  %v56 = vld [vmem:[%s1 + $0x70] sm:$0xff]
  %v57 = vld [vmem:[%s1 + $0x78] sm:$0xff]
  %v58 = vld [vmem:[%s2] sm:$0xff]
  %v59 = vld [vmem:[%s2 + $0x8] sm:$0xff]
  %v60 = vld [vmem:[%s2 + $0x10] sm:$0xff]
  %v61 = vld [vmem:[%s2 + $0x18] sm:$0xff]
  %v62 = vld [vmem:[%s2 + $0x20] sm:$0xff]
  %v63 = vld [vmem:[%s2 + $0x28] sm:$0xff]
  %v64 = vld [vmem:[%s2 + $0x30] sm:$0xff]
  %v65 = vld [vmem:[%s2 + $0x38] sm:$0xff]
  %v66 = vld [vmem:[%s2 + $0x40] sm:$0xff]
  %v67 = vld [vmem:[%s2 + $0x48] sm:$0xff]
  %v68 = vld [vmem:[%s2 + $0x50] sm:$0xff]
  %v69 = vld [vmem:[%s2 + $0x58] sm:$0xff]
  %v70 = vld [vmem:[%s2 + $0x60] sm:$0xff]
  %v71 = vld [vmem:[%s2 + $0x68] sm:$0xff]
  %v72 = vld [vmem:[%s2 + $0x70] sm:$0xff]
  %v73 = vld [vmem:[%s2 + $0x78] sm:$0xff]
  %75 = vset.pattern.permute.xlu0 0
  %76 = vperm.xlu0 %75, %v58
  %v77 = vpop.permute.xlu0 %76
  %80 = vset.pattern.permute.xlu0 0
  %81 = vperm.xlu0 %80, %v59
  %v82 = vpop.permute.xlu0 %81
  %85 = vset.pattern.permute.xlu0 0
  %86 = vperm.xlu0 %85, %v60
  %v87 = vpop.permute.xlu0 %86
  %90 = vset.pattern.permute.xlu0 0
  %91 = vperm.xlu0 %90, %v61
  %v92 = vpop.permute.xlu0 %91
  %95 = vset.pattern.permute.xlu0 0
  %96 = vperm.xlu0 %95, %v62
  %v97 = vpop.permute.xlu0 %96
  %100 = vset.pattern.permute.xlu0 0
  %101 = vperm.xlu0 %100, %v63
  %v102 = vpop.permute.xlu0 %101
  %105 = vset.pattern.permute.xlu0 0
  %106 = vperm.xlu0 %105, %v64
  %v107 = vpop.permute.xlu0 %106
  %110 = vset.pattern.permute.xlu0 0
  %111 = vperm.xlu0 %110, %v65
  %v112 = vpop.permute.xlu0 %111
  %115 = vset.pattern.permute.xlu0 0
  %116 = vperm.xlu0 %115, %v66
  %v117 = vpop.permute.xlu0 %116
  %120 = vset.pattern.permute.xlu0 0
  %121 = vperm.xlu0 %120, %v67
  %v122 = vpop.permute.xlu0 %121
  %125 = vset.pattern.permute.xlu0 0
  %126 = vperm.xlu0 %125, %v68
  %v127 = vpop.permute.xlu0 %126
  %130 = vset.pattern.permute.xlu0 0
  %131 = vperm.xlu0 %130, %v69
  %v132 = vpop.permute.xlu0 %131
  %135 = vset.pattern.permute.xlu0 0
  %136 = vperm.xlu0 %135, %v70
  %v137 = vpop.permute.xlu0 %136
  %140 = vset.pattern.permute.xlu0 0
  %141 = vperm.xlu0 %140, %v71
  %v142 = vpop.permute.xlu0 %141
  %145 = vset.pattern.permute.xlu0 0
  %146 = vperm.xlu0 %145, %v72
  %v147 = vpop.permute.xlu0 %146
  %150 = vset.pattern.permute.xlu0 0
  %151 = vperm.xlu0 %150, %v73
  %v152 = vpop.permute.xlu0 %151
  %v154 = vmul.f32 %v42, %v77
  %v155 = vmul.f32 %v43, %v82
  %v156 = vmul.f32 %v44, %v87
  %v157 = vmul.f32 %v45, %v92
  %v158 = vmul.f32 %v46, %v97
  %v159 = vmul.f32 %v47, %v102
  %v160 = vmul.f32 %v48, %v107
  %v161 = vmul.f32 %v49, %v112
  %v162 = vmul.f32 %v50, %v117
  %v163 = vmul.f32 %v51, %v122
  %v164 = vmul.f32 %v52, %v127
  %v165 = vmul.f32 %v53, %v132
  %v166 = vmul.f32 %v54, %v137
  %v167 = vmul.f32 %v55, %v142
  %v168 = vmul.f32 %v56, %v147
  %v169 = vmul.f32 %v57, %v152
  %v170 = vld [vmem:[%s0] sm:$0xf]
  %v171 = vld [vmem:[%s0 + $0x4] sm:$0xf]
  %v172 = vld [vmem:[%s0 + $0x8] sm:$0xf]
  %v173 = vld [vmem:[%s0 + $0xc] sm:$0xf]
  %v174 = vld [vmem:[%s0 + $0x10] sm:$0xf]
  %v175 = vld [vmem:[%s0 + $0x14] sm:$0xf]
  %v176 = vld [vmem:[%s0 + $0x18] sm:$0xf]
  %v177 = vld [vmem:[%s0 + $0x1c] sm:$0xf]
  %v178 = vld [vmem:[%s0 + $0x20] sm:$0xf]
  %v179 = vld [vmem:[%s0 + $0x24] sm:$0xf]
  %v180 = vld [vmem:[%s0 + $0x28] sm:$0xf]
  %v181 = vld [vmem:[%s0 + $0x2c] sm:$0xf]
  %v182 = vld [vmem:[%s0 + $0x30] sm:$0xf]
  %v183 = vld [vmem:[%s0 + $0x34] sm:$0xf]
  %v184 = vld [vmem:[%s0 + $0x38] sm:$0xf]
  %v185 = vld [vmem:[%s0 + $0x3c] sm:$0xf]
  %v186 = vunpack.c.l.bf16 %v170
  %v187 = vunpack.c.l.bf16 %v171
  %v188 = vunpack.c.l.bf16 %v172
  %v189 = vunpack.c.l.bf16 %v173
  %v190 = vunpack.c.l.bf16 %v174
  %v191 = vunpack.c.l.bf16 %v175
  %v192 = vunpack.c.l.bf16 %v176
  %v193 = vunpack.c.l.bf16 %v177
  %v194 = vunpack.c.l.bf16 %v178
  %v195 = vunpack.c.l.bf16 %v179
  %v196 = vunpack.c.l.bf16 %v180
  %v197 = vunpack.c.l.bf16 %v181
  %v198 = vunpack.c.l.bf16 %v182
  %v199 = vunpack.c.l.bf16 %v183
  %v200 = vunpack.c.l.bf16 %v184
  %v201 = vunpack.c.l.bf16 %v185
  %v202 = vld [vmem:[#allocation2] sm:$0xff]
  %v203 = vld [vmem:[#allocation2 + $0x8] sm:$0xff]
  %v204 = vld [vmem:[#allocation2 + $0x10] sm:$0xff]
  %v205 = vld [vmem:[#allocation2 + $0x18] sm:$0xff]
  %v206 = vld [vmem:[#allocation2 + $0x20] sm:$0xff]
  %v207 = vld [vmem:[#allocation2 + $0x28] sm:$0xff]
  %v208 = vld [vmem:[#allocation2 + $0x30] sm:$0xff]
  %v209 = vld [vmem:[#allocation2 + $0x38] sm:$0xff]
  %v210 = vld [vmem:[#allocation2 + $0x40] sm:$0xff]
  %v211 = vld [vmem:[#allocation2 + $0x48] sm:$0xff]
  %v212 = vld [vmem:[#allocation2 + $0x50] sm:$0xff]
  %v213 = vld [vmem:[#allocation2 + $0x58] sm:$0xff]
  %v214 = vld [vmem:[#allocation2 + $0x60] sm:$0xff]
  %v215 = vld [vmem:[#allocation2 + $0x68] sm:$0xff]
  %v216 = vld [vmem:[#allocation2 + $0x70] sm:$0xff]
  %v217 = vld [vmem:[#allocation2 + $0x78] sm:$0xff]
  %218 = vmatpush.msra.mxu0 %v169
  %219 = vmatpush.msra.mxu0 %v168
  %220 = vmatpush.msra.mxu0 %v167
  %221 = vmatpush.msra.mxu0 %v166
  %222 = vmatpush.msra.mxu0 %v165
  %223 = vmatpush.msra.mxu0 %v164
  %224 = vmatpush.msra.mxu0 %v163
  %225 = vmatpush.msra.mxu0 %v162
  %226 = vmatpush.msra.mxu0 %v161
  %227 = vmatpush.msra.mxu0 %v160
  %228 = vmatpush.msra.mxu0 %v159
  %229 = vmatpush.msra.mxu0 %v158
  %230 = vmatpush.msra.mxu0 %v157
  %231 = vmatpush.msra.mxu0 %v156
  %232 = vmatpush.msra.mxu0 %v155
  %233 = vmatpush.msra.mxu0 %v154
  %234 = vmatmul.f32.gmra.mxu0 %v186
  %v235 = vpop.f32.mrf.mxu0
  %v236 = vadd.f32 0.0, %v235
  %237 = vmatmul.f32.gmra.mxu0 %v187
  %v238 = vpop.f32.mrf.mxu0
  %v239 = vadd.f32 0.0, %v238
  %240 = vmatmul.f32.gmra.mxu0 %v188
  %v241 = vpop.f32.mrf.mxu0
  %v242 = vadd.f32 0.0, %v241
  %243 = vmatmul.f32.gmra.mxu0 %v189
  %v244 = vpop.f32.mrf.mxu0
  %v245 = vadd.f32 0.0, %v244
  %246 = vmatmul.f32.gmra.mxu0 %v190
  %v247 = vpop.f32.mrf.mxu0
  %v248 = vadd.f32 0.0, %v247
  %249 = vmatmul.f32.gmra.mxu0 %v191
  %v250 = vpop.f32.mrf.mxu0
  %v251 = vadd.f32 0.0, %v250
  %252 = vmatmul.f32.gmra.mxu0 %v192
  %v253 = vpop.f32.mrf.mxu0
  %v254 = vadd.f32 0.0, %v253
  %255 = vmatmul.f32.gmra.mxu0 %v193
  %v256 = vpop.f32.mrf.mxu0
  %v257 = vadd.f32 0.0, %v256
  %258 = vmatmul.f32.gmra.mxu0 %v194
  %v259 = vpop.f32.mrf.mxu0
  %v260 = vadd.f32 0.0, %v259
  %261 = vmatmul.f32.gmra.mxu0 %v195
  %v262 = vpop.f32.mrf.mxu0
  %v263 = vadd.f32 0.0, %v262
  %264 = vmatmul.f32.gmra.mxu0 %v196
  %v265 = vpop.f32.mrf.mxu0
  %v266 = vadd.f32 0.0, %v265
  %267 = vmatmul.f32.gmra.mxu0 %v197
  %v268 = vpop.f32.mrf.mxu0
  %v269 = vadd.f32 0.0, %v268
  %270 = vmatmul.f32.gmra.mxu0 %v198
  %v271 = vpop.f32.mrf.mxu0
  %v272 = vadd.f32 0.0, %v271
  %273 = vmatmul.f32.gmra.mxu0 %v199
  %v274 = vpop.f32.mrf.mxu0
  %v275 = vadd.f32 0.0, %v274
  %276 = vmatmul.f32.gmra.mxu0 %v200
  %v277 = vpop.f32.mrf.mxu0
  %v278 = vadd.f32 0.0, %v277
  %279 = vmatmul.f32.gmra.mxu0 %v201
  %v280 = vpop.f32.mrf.mxu0
  %v281 = vadd.f32 0.0, %v280
  %282 = vdwg.mxu0
  %v283 = vadd.f32 %v202, %v236
  %v284 = vadd.f32 %v203, %v239
  %v285 = vadd.f32 %v204, %v242
  %v286 = vadd.f32 %v205, %v245
  %v287 = vadd.f32 %v206, %v248
  %v288 = vadd.f32 %v207, %v251
  %v289 = vadd.f32 %v208, %v254
  %v290 = vadd.f32 %v209, %v257
  %v291 = vadd.f32 %v210, %v260
  %v292 = vadd.f32 %v211, %v263
  %v293 = vadd.f32 %v212, %v266
  %v294 = vadd.f32 %v213, %v269
  %v295 = vadd.f32 %v214, %v272
  %v296 = vadd.f32 %v215, %v275
  %v297 = vadd.f32 %v216, %v278
  %v298 = vadd.f32 %v217, %v281
  %299 = vst [vmem:[#allocation2] sm:$0xff] %v283
  %300 = vst [vmem:[#allocation2 + $0x8] sm:$0xff] %v284
  %301 = vst [vmem:[#allocation2 + $0x10] sm:$0xff] %v285
  %302 = vst [vmem:[#allocation2 + $0x18] sm:$0xff] %v286
  %303 = vst [vmem:[#allocation2 + $0x20] sm:$0xff] %v287
  %304 = vst [vmem:[#allocation2 + $0x28] sm:$0xff] %v288
  %305 = vst [vmem:[#allocation2 + $0x30] sm:$0xff] %v289
  %306 = vst [vmem:[#allocation2 + $0x38] sm:$0xff] %v290
  %307 = vst [vmem:[#allocation2 + $0x40] sm:$0xff] %v291
  %308 = vst [vmem:[#allocation2 + $0x48] sm:$0xff] %v292
  %309 = vst [vmem:[#allocation2 + $0x50] sm:$0xff] %v293
  %310 = vst [vmem:[#allocation2 + $0x58] sm:$0xff] %v294
  %311 = vst [vmem:[#allocation2 + $0x60] sm:$0xff] %v295
  %312 = vst [vmem:[#allocation2 + $0x68] sm:$0xff] %v296
  %313 = vst [vmem:[#allocation2 + $0x70] sm:$0xff] %v297
  %314 = vst [vmem:[#allocation2 + $0x78] sm:$0xff] %v298
  // Predicated region
  $region26: #{hgdm_forward.8} parent=0 // pred_check
    %p315 = pneg %p22
  $region27: #{hgdm_forward.8} parent=0 // pred_check_branch
    %317 = sbr.rel (%p315) target = $region29
  $region28: #{hgdm_forward.8} parent=0 // pred_region
    %v318 = vld [vmem:[#allocation2] sm:$0xff]
    %v319 = vld [vmem:[#allocation2 + $0x8] sm:$0xff]
    %v320 = vld [vmem:[#allocation2 + $0x10] sm:$0xff]
    %v321 = vld [vmem:[#allocation2 + $0x18] sm:$0xff]
    %v322 = vld [vmem:[#allocation2 + $0x20] sm:$0xff]
    %v323 = vld [vmem:[#allocation2 + $0x28] sm:$0xff]
    %v324 = vld [vmem:[#allocation2 + $0x30] sm:$0xff]
    %v325 = vld [vmem:[#allocation2 + $0x38] sm:$0xff]
    %v326 = vld [vmem:[#allocation2 + $0x40] sm:$0xff]
    %v327 = vld [vmem:[#allocation2 + $0x48] sm:$0xff]
    %v328 = vld [vmem:[#allocation2 + $0x50] sm:$0xff]
    %v329 = vld [vmem:[#allocation2 + $0x58] sm:$0xff]
    %v330 = vld [vmem:[#allocation2 + $0x60] sm:$0xff]
    %v331 = vld [vmem:[#allocation2 + $0x68] sm:$0xff]
    %v332 = vld [vmem:[#allocation2 + $0x70] sm:$0xff]
    %v333 = vld [vmem:[#allocation2 + $0x78] sm:$0xff]
    %v334 = vld [vmem:[%s3] sm:$0xff]
    %v335 = vld [vmem:[%s3 + $0x8] sm:$0xff]
    %v336 = vld [vmem:[%s3 + $0x10] sm:$0xff]
    %v337 = vld [vmem:[%s3 + $0x18] sm:$0xff]
    %v338 = vld [vmem:[%s3 + $0x20] sm:$0xff]
    %v339 = vld [vmem:[%s3 + $0x28] sm:$0xff]
    %v340 = vld [vmem:[%s3 + $0x30] sm:$0xff]
    %v341 = vld [vmem:[%s3 + $0x38] sm:$0xff]
    %v342 = vld [vmem:[%s3 + $0x40] sm:$0xff]
    %v343 = vld [vmem:[%s3 + $0x48] sm:$0xff]
    %v344 = vld [vmem:[%s3 + $0x50] sm:$0xff]
    %v345 = vld [vmem:[%s3 + $0x58] sm:$0xff]
    %v346 = vld [vmem:[%s3 + $0x60] sm:$0xff]
    %v347 = vld [vmem:[%s3 + $0x68] sm:$0xff]
    %v348 = vld [vmem:[%s3 + $0x70] sm:$0xff]
    %v349 = vld [vmem:[%s3 + $0x78] sm:$0xff]
    %351 = vset.pattern.permute.xlu0 0
    %352 = vperm.xlu0 %351, %v334
    %v353 = vpop.permute.xlu0 %352
    %356 = vset.pattern.permute.xlu0 0
    %357 = vperm.xlu0 %356, %v335
    %v358 = vpop.permute.xlu0 %357
    %361 = vset.pattern.permute.xlu0 0
    %362 = vperm.xlu0 %361, %v336
    %v363 = vpop.permute.xlu0 %362
    %366 = vset.pattern.permute.xlu0 0
    %367 = vperm.xlu0 %366, %v337
    %v368 = vpop.permute.xlu0 %367
    %371 = vset.pattern.permute.xlu0 0
    %372 = vperm.xlu0 %371, %v338
    %v373 = vpop.permute.xlu0 %372
    %376 = vset.pattern.permute.xlu0 0
    %377 = vperm.xlu0 %376, %v339
    %v378 = vpop.permute.xlu0 %377
    %381 = vset.pattern.permute.xlu0 0
    %382 = vperm.xlu0 %381, %v340
    %v383 = vpop.permute.xlu0 %382
    %386 = vset.pattern.permute.xlu0 0
    %387 = vperm.xlu0 %386, %v341
    %v388 = vpop.permute.xlu0 %387
    %391 = vset.pattern.permute.xlu0 0
    %392 = vperm.xlu0 %391, %v342
    %v393 = vpop.permute.xlu0 %392
    %396 = vset.pattern.permute.xlu0 0
    %397 = vperm.xlu0 %396, %v343
    %v398 = vpop.permute.xlu0 %397
    %401 = vset.pattern.permute.xlu0 0
    %402 = vperm.xlu0 %401, %v344
    %v403 = vpop.permute.xlu0 %402
    %406 = vset.pattern.permute.xlu0 0
    %407 = vperm.xlu0 %406, %v345
    %v408 = vpop.permute.xlu0 %407
    %411 = vset.pattern.permute.xlu0 0
    %412 = vperm.xlu0 %411, %v346
    %v413 = vpop.permute.xlu0 %412
    %416 = vset.pattern.permute.xlu0 0
    %417 = vperm.xlu0 %416, %v347
    %v418 = vpop.permute.xlu0 %417
    %421 = vset.pattern.permute.xlu0 0
    %422 = vperm.xlu0 %421, %v348
    %v423 = vpop.permute.xlu0 %422
    %426 = vset.pattern.permute.xlu0 0
    %427 = vperm.xlu0 %426, %v349
    %v428 = vpop.permute.xlu0 %427
    %v430 = vmul.f32 %v318, %v353
    %v431 = vmul.f32 %v319, %v358
    %v432 = vmul.f32 %v320, %v363
    %v433 = vmul.f32 %v321, %v368
    %v434 = vmul.f32 %v322, %v373
    %v435 = vmul.f32 %v323, %v378
    %v436 = vmul.f32 %v324, %v383
    %v437 = vmul.f32 %v325, %v388
    %v438 = vmul.f32 %v326, %v393
    %v439 = vmul.f32 %v327, %v398
    %v440 = vmul.f32 %v328, %v403
    %v441 = vmul.f32 %v329, %v408
    %v442 = vmul.f32 %v330, %v413
    %v443 = vmul.f32 %v331, %v418
    %v444 = vmul.f32 %v332, %v423
    %v445 = vmul.f32 %v333, %v428
    %vm446 = vcmp.ge.f32.partialorder %v430, 0.0
    %vm447 = vcmp.ge.f32.partialorder %v431, 0.0
    %vm448 = vcmp.ge.f32.partialorder %v432, 0.0
    %vm449 = vcmp.ge.f32.partialorder %v433, 0.0
    %vm450 = vcmp.ge.f32.partialorder %v434, 0.0
    %vm451 = vcmp.ge.f32.partialorder %v435, 0.0
    %vm452 = vcmp.ge.f32.partialorder %v436, 0.0
    %vm453 = vcmp.ge.f32.partialorder %v437, 0.0
    %vm454 = vcmp.ge.f32.partialorder %v438, 0.0
    %vm455 = vcmp.ge.f32.partialorder %v439, 0.0
    %vm456 = vcmp.ge.f32.partialorder %v440, 0.0
    %vm457 = vcmp.ge.f32.partialorder %v441, 0.0
    %vm458 = vcmp.ge.f32.partialorder %v442, 0.0
    %vm459 = vcmp.ge.f32.partialorder %v443, 0.0
    %vm460 = vcmp.ge.f32.partialorder %v444, 0.0
    %vm461 = vcmp.ge.f32.partialorder %v445, 0.0
    %v462 = vmul.f32 %v430, 0.5
    %v463 = vmul.f32 %v431, 0.5
    %v464 = vmul.f32 %v432, 0.5
    %v465 = vmul.f32 %v433, 0.5
    %v466 = vmul.f32 %v434, 0.5
    %v467 = vmul.f32 %v435, 0.5
    %v468 = vmul.f32 %v436, 0.5
    %v469 = vmul.f32 %v437, 0.5
    %v470 = vmul.f32 %v438, 0.5
    %v471 = vmul.f32 %v439, 0.5
    %v472 = vmul.f32 %v440, 0.5
    %v473 = vmul.f32 %v441, 0.5
    %v474 = vmul.f32 %v442, 0.5
    %v475 = vmul.f32 %v443, 0.5
    %v476 = vmul.f32 %v444, 0.5
    %v477 = vmul.f32 %v445, 0.5
    %v478 = vsel %vm446, %v430, %v462
    %v479 = vsel %vm447, %v431, %v463
    %v480 = vsel %vm448, %v432, %v464
    %v481 = vsel %vm449, %v433, %v465
    %v482 = vsel %vm450, %v434, %v466
    %v483 = vsel %vm451, %v435, %v467
    %v484 = vsel %vm452, %v436, %v468
    %v485 = vsel %vm453, %v437, %v469
    %v486 = vsel %vm454, %v438, %v470
    %v487 = vsel %vm455, %v439, %v471
    %v488 = vsel %vm456, %v440, %v472
    %v489 = vsel %vm457, %v441, %v473
    %v490 = vsel %vm458, %v442, %v474
    %v491 = vsel %vm459, %v443, %v475
    %v492 = vsel %vm460, %v444, %v476
    %v493 = vsel %vm461, %v445, %v477
    %v494 = vmul.f32 %v478, %v478
    %v495 = vmul.f32 %v479, %v479
    %v496 = vmul.f32 %v480, %v480
    %v497 = vmul.f32 %v481, %v481
    %v498 = vmul.f32 %v482, %v482
    %v499 = vmul.f32 %v483, %v483
    %v500 = vmul.f32 %v484, %v484
    %v501 = vmul.f32 %v485, %v485
    %v502 = vmul.f32 %v486, %v486
    %v503 = vmul.f32 %v487, %v487
    %v504 = vmul.f32 %v488, %v488
    %v505 = vmul.f32 %v489, %v489
    %v506 = vmul.f32 %v490, %v490
    %v507 = vmul.f32 %v491, %v491
    %v508 = vmul.f32 %v492, %v492
    %v509 = vmul.f32 %v493, %v493
    %510 = vadd.xlane.f32.xlu0 %v494
    %v511 = vpop.xlane.xlu0 %510
    %512 = vadd.xlane.f32.xlu0 %v495
    %v513 = vpop.xlane.xlu0 %512
    %514 = vadd.xlane.f32.xlu0 %v496
    %v515 = vpop.xlane.xlu0 %514
    %516 = vadd.xlane.f32.xlu0 %v497
    %v517 = vpop.xlane.xlu0 %516
    %518 = vadd.xlane.f32.xlu0 %v498
    %v519 = vpop.xlane.xlu0 %518
    %520 = vadd.xlane.f32.xlu0 %v499
    %v521 = vpop.xlane.xlu0 %520
    %522 = vadd.xlane.f32.xlu0 %v500
    %v523 = vpop.xlane.xlu0 %522
    %524 = vadd.xlane.f32.xlu0 %v501
    %v525 = vpop.xlane.xlu0 %524
    %526 = vadd.xlane.f32.xlu0 %v502
    %v527 = vpop.xlane.xlu0 %526
    %528 = vadd.xlane.f32.xlu0 %v503
    %v529 = vpop.xlane.xlu0 %528
    %530 = vadd.xlane.f32.xlu0 %v504
    %v531 = vpop.xlane.xlu0 %530
    %532 = vadd.xlane.f32.xlu0 %v505
    %v533 = vpop.xlane.xlu0 %532
    %534 = vadd.xlane.f32.xlu0 %v506
    %v535 = vpop.xlane.xlu0 %534
    %536 = vadd.xlane.f32.xlu0 %v507
    %v537 = vpop.xlane.xlu0 %536
    %538 = vadd.xlane.f32.xlu0 %v508
    %v539 = vpop.xlane.xlu0 %538
    %540 = vadd.xlane.f32.xlu0 %v509
    %v541 = vpop.xlane.xlu0 %540
    %v542 = vrsqrt.pop %v511
    %v543 = vmul.f32 %v542, %v511
    %v544 = vmul.f32 %v543, %v542
    %v545 = vmul.f32 0.5, %v544
    %v546 = vsub.f32 1.5, %v545
    %v547 = vmul.f32 %v542, %v546
    %v548 = vmul.f32 %v511, %v547
    %vm549 = vcmp.eq.f32.partialorder %v511, inf
    %v550 = vsel %vm549, %v511, %v548
    %vm551 = vcmp.eq.f32.partialorder %v511, 0.0
    %v552 = vand.u32 %v511, 2147483648
    %v553 = vsel %vm551, %v552, %v550
    %v554 = vrsqrt.pop %v513
    %v555 = vmul.f32 %v554, %v513
    %v556 = vmul.f32 %v555, %v554
    %v557 = vmul.f32 0.5, %v556
    %v558 = vsub.f32 1.5, %v557
    %v559 = vmul.f32 %v554, %v558
    %v560 = vmul.f32 %v513, %v559
    %vm561 = vcmp.eq.f32.partialorder %v513, inf
    %v562 = vsel %vm561, %v513, %v560
    %vm563 = vcmp.eq.f32.partialorder %v513, 0.0
    %v564 = vand.u32 %v513, 2147483648
    %v565 = vsel %vm563, %v564, %v562
    %v566 = vrsqrt.pop %v515
    %v567 = vmul.f32 %v566, %v515
    %v568 = vmul.f32 %v567, %v566
    %v569 = vmul.f32 0.5, %v568
    %v570 = vsub.f32 1.5, %v569
    %v571 = vmul.f32 %v566, %v570
    %v572 = vmul.f32 %v515, %v571
    %vm573 = vcmp.eq.f32.partialorder %v515, inf
    %v574 = vsel %vm573, %v515, %v572
    %vm575 = vcmp.eq.f32.partialorder %v515, 0.0
    %v576 = vand.u32 %v515, 2147483648
    %v577 = vsel %vm575, %v576, %v574
    %v578 = vrsqrt.pop %v517
    %v579 = vmul.f32 %v578, %v517
    %v580 = vmul.f32 %v579, %v578
    %v581 = vmul.f32 0.5, %v580
    %v582 = vsub.f32 1.5, %v581
    %v583 = vmul.f32 %v578, %v582
    %v584 = vmul.f32 %v517, %v583
    %vm585 = vcmp.eq.f32.partialorder %v517, inf
    %v586 = vsel %vm585, %v517, %v584
    %vm587 = vcmp.eq.f32.partialorder %v517, 0.0
    %v588 = vand.u32 %v517, 2147483648
    %v589 = vsel %vm587, %v588, %v586
    %v590 = vrsqrt.pop %v519
    %v591 = vmul.f32 %v590, %v519
    %v592 = vmul.f32 %v591, %v590
    %v593 = vmul.f32 0.5, %v592
    %v594 = vsub.f32 1.5, %v593
    %v595 = vmul.f32 %v590, %v594
    %v596 = vmul.f32 %v519, %v595
    %vm597 = vcmp.eq.f32.partialorder %v519, inf
    %v598 = vsel %vm597, %v519, %v596
    %vm599 = vcmp.eq.f32.partialorder %v519, 0.0
    %v600 = vand.u32 %v519, 2147483648
    %v601 = vsel %vm599, %v600, %v598
    %v602 = vrsqrt.pop %v521
    %v603 = vmul.f32 %v602, %v521
    %v604 = vmul.f32 %v603, %v602
    %v605 = vmul.f32 0.5, %v604
    %v606 = vsub.f32 1.5, %v605
    %v607 = vmul.f32 %v602, %v606
    %v608 = vmul.f32 %v521, %v607
    %vm609 = vcmp.eq.f32.partialorder %v521, inf
    %v610 = vsel %vm609, %v521, %v608
    %vm611 = vcmp.eq.f32.partialorder %v521, 0.0
    %v612 = vand.u32 %v521, 2147483648
    %v613 = vsel %vm611, %v612, %v610
    %v614 = vrsqrt.pop %v523
    %v615 = vmul.f32 %v614, %v523
    %v616 = vmul.f32 %v615, %v614
    %v617 = vmul.f32 0.5, %v616
    %v618 = vsub.f32 1.5, %v617
    %v619 = vmul.f32 %v614, %v618
    %v620 = vmul.f32 %v523, %v619
    %vm621 = vcmp.eq.f32.partialorder %v523, inf
    %v622 = vsel %vm621, %v523, %v620
    %vm623 = vcmp.eq.f32.partialorder %v523, 0.0
    %v624 = vand.u32 %v523, 2147483648
    %v625 = vsel %vm623, %v624, %v622
    %v626 = vrsqrt.pop %v525
    %v627 = vmul.f32 %v626, %v525
    %v628 = vmul.f32 %v627, %v626
    %v629 = vmul.f32 0.5, %v628
    %v630 = vsub.f32 1.5, %v629
    %v631 = vmul.f32 %v626, %v630
    %v632 = vmul.f32 %v525, %v631
    %vm633 = vcmp.eq.f32.partialorder %v525, inf
    %v634 = vsel %vm633, %v525, %v632
    %vm635 = vcmp.eq.f32.partialorder %v525, 0.0
    %v636 = vand.u32 %v525, 2147483648
    %v637 = vsel %vm635, %v636, %v634
    %v638 = vrsqrt.pop %v527
    %v639 = vmul.f32 %v638, %v527
    %v640 = vmul.f32 %v639, %v638
    %v641 = vmul.f32 0.5, %v640
    %v642 = vsub.f32 1.5, %v641
    %v643 = vmul.f32 %v638, %v642
    %v644 = vmul.f32 %v527, %v643
    %vm645 = vcmp.eq.f32.partialorder %v527, inf
    %v646 = vsel %vm645, %v527, %v644
    %vm647 = vcmp.eq.f32.partialorder %v527, 0.0
    %v648 = vand.u32 %v527, 2147483648
    %v649 = vsel %vm647, %v648, %v646
    %v650 = vrsqrt.pop %v529
    %v651 = vmul.f32 %v650, %v529
    %v652 = vmul.f32 %v651, %v650
    %v653 = vmul.f32 0.5, %v652
    %v654 = vsub.f32 1.5, %v653
    %v655 = vmul.f32 %v650, %v654
    %v656 = vmul.f32 %v529, %v655
    %vm657 = vcmp.eq.f32.partialorder %v529, inf
    %v658 = vsel %vm657, %v529, %v656
    %vm659 = vcmp.eq.f32.partialorder %v529, 0.0
    %v660 = vand.u32 %v529, 2147483648
    %v661 = vsel %vm659, %v660, %v658
    %v662 = vrsqrt.pop %v531
    %v663 = vmul.f32 %v662, %v531
    %v664 = vmul.f32 %v663, %v662
    %v665 = vmul.f32 0.5, %v664
    %v666 = vsub.f32 1.5, %v665
    %v667 = vmul.f32 %v662, %v666
    %v668 = vmul.f32 %v531, %v667
    %vm669 = vcmp.eq.f32.partialorder %v531, inf
    %v670 = vsel %vm669, %v531, %v668
    %vm671 = vcmp.eq.f32.partialorder %v531, 0.0
    %v672 = vand.u32 %v531, 2147483648
    %v673 = vsel %vm671, %v672, %v670
    %v674 = vrsqrt.pop %v533
    %v675 = vmul.f32 %v674, %v533
    %v676 = vmul.f32 %v675, %v674
    %v677 = vmul.f32 0.5, %v676
    %v678 = vsub.f32 1.5, %v677
    %v679 = vmul.f32 %v674, %v678
    %v680 = vmul.f32 %v533, %v679
    %vm681 = vcmp.eq.f32.partialorder %v533, inf
    %v682 = vsel %vm681, %v533, %v680
    %vm683 = vcmp.eq.f32.partialorder %v533, 0.0
    %v684 = vand.u32 %v533, 2147483648
    %v685 = vsel %vm683, %v684, %v682
    %v686 = vrsqrt.pop %v535
    %v687 = vmul.f32 %v686, %v535
    %v688 = vmul.f32 %v687, %v686
    %v689 = vmul.f32 0.5, %v688
    %v690 = vsub.f32 1.5, %v689
    %v691 = vmul.f32 %v686, %v690
    %v692 = vmul.f32 %v535, %v691
    %vm693 = vcmp.eq.f32.partialorder %v535, inf
    %v694 = vsel %vm693, %v535, %v692
    %vm695 = vcmp.eq.f32.partialorder %v535, 0.0
    %v696 = vand.u32 %v535, 2147483648
    %v697 = vsel %vm695, %v696, %v694
    %v698 = vrsqrt.pop %v537
    %v699 = vmul.f32 %v698, %v537
    %v700 = vmul.f32 %v699, %v698
    %v701 = vmul.f32 0.5, %v700
    %v702 = vsub.f32 1.5, %v701
    %v703 = vmul.f32 %v698, %v702
    %v704 = vmul.f32 %v537, %v703
    %vm705 = vcmp.eq.f32.partialorder %v537, inf
    %v706 = vsel %vm705, %v537, %v704
    %vm707 = vcmp.eq.f32.partialorder %v537, 0.0
    %v708 = vand.u32 %v537, 2147483648
    %v709 = vsel %vm707, %v708, %v706
    %v710 = vrsqrt.pop %v539
    %v711 = vmul.f32 %v710, %v539
    %v712 = vmul.f32 %v711, %v710
    %v713 = vmul.f32 0.5, %v712
    %v714 = vsub.f32 1.5, %v713
    %v715 = vmul.f32 %v710, %v714
    %v716 = vmul.f32 %v539, %v715
    %vm717 = vcmp.eq.f32.partialorder %v539, inf
    %v718 = vsel %vm717, %v539, %v716
    %vm719 = vcmp.eq.f32.partialorder %v539, 0.0
    %v720 = vand.u32 %v539, 2147483648
    %v721 = vsel %vm719, %v720, %v718
    %v722 = vrsqrt.pop %v541
    %v723 = vmul.f32 %v722, %v541
    %v724 = vmul.f32 %v723, %v722
    %v725 = vmul.f32 0.5, %v724
    %v726 = vsub.f32 1.5, %v725
    %v727 = vmul.f32 %v722, %v726
    %v728 = vmul.f32 %v541, %v727
    %vm729 = vcmp.eq.f32.partialorder %v541, inf
    %v730 = vsel %vm729, %v541, %v728
    %vm731 = vcmp.eq.f32.partialorder %v541, 0.0
    %v732 = vand.u32 %v541, 2147483648
    %v733 = vsel %vm731, %v732, %v730
    %v734 = vmax.f32 %v553, 1e-12
    %v735 = vmax.f32 %v565, 1e-12
    %v736 = vmax.f32 %v577, 1e-12
    %v737 = vmax.f32 %v589, 1e-12
    %v738 = vmax.f32 %v601, 1e-12
    %v739 = vmax.f32 %v613, 1e-12
    %v740 = vmax.f32 %v625, 1e-12
    %v741 = vmax.f32 %v637, 1e-12
    %v742 = vmax.f32 %v649, 1e-12
    %v743 = vmax.f32 %v661, 1e-12
    %v744 = vmax.f32 %v673, 1e-12
    %v745 = vmax.f32 %v685, 1e-12
    %v746 = vmax.f32 %v697, 1e-12
    %v747 = vmax.f32 %v709, 1e-12
    %v748 = vmax.f32 %v721, 1e-12
    %v749 = vmax.f32 %v733, 1e-12
    %v750 = vrcp.pop %v734
    %v751 = vmul.f32 %v734, %v750
    %v752 = vsub.f32 1.0, %v751
    %v753 = vmul.f32 %v750, %v752
    %v754 = vadd.f32 %v750, %v753
    %vm755 = vweird.f32 %v734
    %vm756 = vweird.f32 %v750
    %vm757 = vmor %vm755, %vm756
    %v758 = vsel %vm757, %v750, %v754
    %v759 = vand.u32 2147483647, %v734
    %vm760 = vcmp.eq.f32.partialorder %v759, 8.507059e+37
    %v761 = vand.u32 %v734, 2147483648
    %v762 = vor.u32 1.1754944e-38, %v761
    %v763 = vsel %vm760, %v762, %v758
    %v764 = vmul.f32 %v478, %v763
    %v765 = vrcp.pop %v735
    %v766 = vmul.f32 %v735, %v765
    %v767 = vsub.f32 1.0, %v766
    %v768 = vmul.f32 %v765, %v767
    %v769 = vadd.f32 %v765, %v768
    %vm770 = vweird.f32 %v735
    %vm771 = vweird.f32 %v765
    %vm772 = vmor %vm770, %vm771
    %v773 = vsel %vm772, %v765, %v769
    %v774 = vand.u32 2147483647, %v735
    %vm775 = vcmp.eq.f32.partialorder %v774, 8.507059e+37
    %v776 = vand.u32 %v735, 2147483648
    %v777 = vor.u32 1.1754944e-38, %v776
    %v778 = vsel %vm775, %v777, %v773
    %v779 = vmul.f32 %v479, %v778
    %v780 = vrcp.pop %v736
    %v781 = vmul.f32 %v736, %v780
    %v782 = vsub.f32 1.0, %v781
    %v783 = vmul.f32 %v780, %v782
    %v784 = vadd.f32 %v780, %v783
    %vm785 = vweird.f32 %v736
    %vm786 = vweird.f32 %v780
    %vm787 = vmor %vm785, %vm786
    %v788 = vsel %vm787, %v780, %v784
    %v789 = vand.u32 2147483647, %v736
    %vm790 = vcmp.eq.f32.partialorder %v789, 8.507059e+37
    %v791 = vand.u32 %v736, 2147483648
    %v792 = vor.u32 1.1754944e-38, %v791
    %v793 = vsel %vm790, %v792, %v788
    %v794 = vmul.f32 %v480, %v793
    %v795 = vrcp.pop %v737
    %v796 = vmul.f32 %v737, %v795
    %v797 = vsub.f32 1.0, %v796
    %v798 = vmul.f32 %v795, %v797
    %v799 = vadd.f32 %v795, %v798
    %vm800 = vweird.f32 %v737
    %vm801 = vweird.f32 %v795
    %vm802 = vmor %vm800, %vm801
    %v803 = vsel %vm802, %v795, %v799
    %v804 = vand.u32 2147483647, %v737
    %vm805 = vcmp.eq.f32.partialorder %v804, 8.507059e+37
    %v806 = vand.u32 %v737, 2147483648
    %v807 = vor.u32 1.1754944e-38, %v806
    %v808 = vsel %vm805, %v807, %v803
    %v809 = vmul.f32 %v481, %v808
    %v810 = vrcp.pop %v738
    %v811 = vmul.f32 %v738, %v810
    %v812 = vsub.f32 1.0, %v811
    %v813 = vmul.f32 %v810, %v812
    %v814 = vadd.f32 %v810, %v813
    %vm815 = vweird.f32 %v738
    %vm816 = vweird.f32 %v810
    %vm817 = vmor %vm815, %vm816
    %v818 = vsel %vm817, %v810, %v814
    %v819 = vand.u32 2147483647, %v738
    %vm820 = vcmp.eq.f32.partialorder %v819, 8.507059e+37
    %v821 = vand.u32 %v738, 2147483648
    %v822 = vor.u32 1.1754944e-38, %v821
    %v823 = vsel %vm820, %v822, %v818
    %v824 = vmul.f32 %v482, %v823
    %v825 = vrcp.pop %v739
    %v826 = vmul.f32 %v739, %v825
    %v827 = vsub.f32 1.0, %v826
    %v828 = vmul.f32 %v825, %v827
    %v829 = vadd.f32 %v825, %v828
    %vm830 = vweird.f32 %v739
    %vm831 = vweird.f32 %v825
    %vm832 = vmor %vm830, %vm831
    %v833 = vsel %vm832, %v825, %v829
    %v834 = vand.u32 2147483647, %v739
    %vm835 = vcmp.eq.f32.partialorder %v834, 8.507059e+37
    %v836 = vand.u32 %v739, 2147483648
    %v837 = vor.u32 1.1754944e-38, %v836
    %v838 = vsel %vm835, %v837, %v833
    %v839 = vmul.f32 %v483, %v838
    %v840 = vrcp.pop %v740
    %v841 = vmul.f32 %v740, %v840
    %v842 = vsub.f32 1.0, %v841
    %v843 = vmul.f32 %v840, %v842
    %v844 = vadd.f32 %v840, %v843
    %vm845 = vweird.f32 %v740
    %vm846 = vweird.f32 %v840
    %vm847 = vmor %vm845, %vm846
    %v848 = vsel %vm847, %v840, %v844
    %v849 = vand.u32 2147483647, %v740
    %vm850 = vcmp.eq.f32.partialorder %v849, 8.507059e+37
    %v851 = vand.u32 %v740, 2147483648
    %v852 = vor.u32 1.1754944e-38, %v851
    %v853 = vsel %vm850, %v852, %v848
    %v854 = vmul.f32 %v484, %v853
    %v855 = vrcp.pop %v741
    %v856 = vmul.f32 %v741, %v855
    %v857 = vsub.f32 1.0, %v856
    %v858 = vmul.f32 %v855, %v857
    %v859 = vadd.f32 %v855, %v858
    %vm860 = vweird.f32 %v741
    %vm861 = vweird.f32 %v855
    %vm862 = vmor %vm860, %vm861
    %v863 = vsel %vm862, %v855, %v859
    %v864 = vand.u32 2147483647, %v741
    %vm865 = vcmp.eq.f32.partialorder %v864, 8.507059e+37
    %v866 = vand.u32 %v741, 2147483648
    %v867 = vor.u32 1.1754944e-38, %v866
    %v868 = vsel %vm865, %v867, %v863
    %v869 = vmul.f32 %v485, %v868
    %v870 = vrcp.pop %v742
    %v871 = vmul.f32 %v742, %v870
    %v872 = vsub.f32 1.0, %v871
    %v873 = vmul.f32 %v870, %v872
    %v874 = vadd.f32 %v870, %v873
    %vm875 = vweird.f32 %v742
    %vm876 = vweird.f32 %v870
    %vm877 = vmor %vm875, %vm876
    %v878 = vsel %vm877, %v870, %v874
    %v879 = vand.u32 2147483647, %v742
    %vm880 = vcmp.eq.f32.partialorder %v879, 8.507059e+37
    %v881 = vand.u32 %v742, 2147483648
    %v882 = vor.u32 1.1754944e-38, %v881
    %v883 = vsel %vm880, %v882, %v878
    %v884 = vmul.f32 %v486, %v883
    %v885 = vrcp.pop %v743
    %v886 = vmul.f32 %v743, %v885
    %v887 = vsub.f32 1.0, %v886
    %v888 = vmul.f32 %v885, %v887
    %v889 = vadd.f32 %v885, %v888
    %vm890 = vweird.f32 %v743
    %vm891 = vweird.f32 %v885
    %vm892 = vmor %vm890, %vm891
    %v893 = vsel %vm892, %v885, %v889
    %v894 = vand.u32 2147483647, %v743
    %vm895 = vcmp.eq.f32.partialorder %v894, 8.507059e+37
    %v896 = vand.u32 %v743, 2147483648
    %v897 = vor.u32 1.1754944e-38, %v896
    %v898 = vsel %vm895, %v897, %v893
    %v899 = vmul.f32 %v487, %v898
    %v900 = vrcp.pop %v744
    %v901 = vmul.f32 %v744, %v900
    %v902 = vsub.f32 1.0, %v901
    %v903 = vmul.f32 %v900, %v902
    %v904 = vadd.f32 %v900, %v903
    %vm905 = vweird.f32 %v744
    %vm906 = vweird.f32 %v900
    %vm907 = vmor %vm905, %vm906
    %v908 = vsel %vm907, %v900, %v904
    %v909 = vand.u32 2147483647, %v744
    %vm910 = vcmp.eq.f32.partialorder %v909, 8.507059e+37
    %v911 = vand.u32 %v744, 2147483648
    %v912 = vor.u32 1.1754944e-38, %v911
    %v913 = vsel %vm910, %v912, %v908
    %v914 = vmul.f32 %v488, %v913
    %v915 = vrcp.pop %v745
    %v916 = vmul.f32 %v745, %v915
    %v917 = vsub.f32 1.0, %v916
    %v918 = vmul.f32 %v915, %v917
    %v919 = vadd.f32 %v915, %v918
    %vm920 = vweird.f32 %v745
    %vm921 = vweird.f32 %v915
    %vm922 = vmor %vm920, %vm921
    %v923 = vsel %vm922, %v915, %v919
    %v924 = vand.u32 2147483647, %v745
    %vm925 = vcmp.eq.f32.partialorder %v924, 8.507059e+37
    %v926 = vand.u32 %v745, 2147483648
    %v927 = vor.u32 1.1754944e-38, %v926
    %v928 = vsel %vm925, %v927, %v923
    %v929 = vmul.f32 %v489, %v928
    %v930 = vrcp.pop %v746
    %v931 = vmul.f32 %v746, %v930
    %v932 = vsub.f32 1.0, %v931
    %v933 = vmul.f32 %v930, %v932
    %v934 = vadd.f32 %v930, %v933
    %vm935 = vweird.f32 %v746
    %vm936 = vweird.f32 %v930
    %vm937 = vmor %vm935, %vm936
    %v938 = vsel %vm937, %v930, %v934
    %v939 = vand.u32 2147483647, %v746
    %vm940 = vcmp.eq.f32.partialorder %v939, 8.507059e+37
    %v941 = vand.u32 %v746, 2147483648
    %v942 = vor.u32 1.1754944e-38, %v941
    %v943 = vsel %vm940, %v942, %v938
    %v944 = vmul.f32 %v490, %v943
    %v945 = vrcp.pop %v747
    %v946 = vmul.f32 %v747, %v945
    %v947 = vsub.f32 1.0, %v946
    %v948 = vmul.f32 %v945, %v947
    %v949 = vadd.f32 %v945, %v948
    %vm950 = vweird.f32 %v747
    %vm951 = vweird.f32 %v945
    %vm952 = vmor %vm950, %vm951
    %v953 = vsel %vm952, %v945, %v949
    %v954 = vand.u32 2147483647, %v747
    %vm955 = vcmp.eq.f32.partialorder %v954, 8.507059e+37
    %v956 = vand.u32 %v747, 2147483648
    %v957 = vor.u32 1.1754944e-38, %v956
    %v958 = vsel %vm955, %v957, %v953
    %v959 = vmul.f32 %v491, %v958
    %v960 = vrcp.pop %v748
    %v961 = vmul.f32 %v748, %v960
    %v962 = vsub.f32 1.0, %v961
    %v963 = vmul.f32 %v960, %v962
    %v964 = vadd.f32 %v960, %v963
    %vm965 = vweird.f32 %v748
    %vm966 = vweird.f32 %v960
    %vm967 = vmor %vm965, %vm966
    %v968 = vsel %vm967, %v960, %v964
    %v969 = vand.u32 2147483647, %v748
    %vm970 = vcmp.eq.f32.partialorder %v969, 8.507059e+37
    %v971 = vand.u32 %v748, 2147483648
    %v972 = vor.u32 1.1754944e-38, %v971
    %v973 = vsel %vm970, %v972, %v968
    %v974 = vmul.f32 %v492, %v973
    %v975 = vrcp.pop %v749
    %v976 = vmul.f32 %v749, %v975
    %v977 = vsub.f32 1.0, %v976
    %v978 = vmul.f32 %v975, %v977
    %v979 = vadd.f32 %v975, %v978
    %vm980 = vweird.f32 %v749
    %vm981 = vweird.f32 %v975
    %vm982 = vmor %vm980, %vm981
    %v983 = vsel %vm982, %v975, %v979
    %v984 = vand.u32 2147483647, %v749
    %vm985 = vcmp.eq.f32.partialorder %v984, 8.507059e+37
    %v986 = vand.u32 %v749, 2147483648
    %v987 = vor.u32 1.1754944e-38, %v986
    %v988 = vsel %vm985, %v987, %v983
    %v989 = vmul.f32 %v493, %v988
    %990 = vst [vmem:[%s5] sm:$0xff] %v764
    %991 = vst [vmem:[%s5 + $0x8] sm:$0xff] %v779
    %992 = vst [vmem:[%s5 + $0x10] sm:$0xff] %v794
    %993 = vst [vmem:[%s5 + $0x18] sm:$0xff] %v809
    %994 = vst [vmem:[%s5 + $0x20] sm:$0xff] %v824
    %995 = vst [vmem:[%s5 + $0x28] sm:$0xff] %v839
    %996 = vst [vmem:[%s5 + $0x30] sm:$0xff] %v854
    %997 = vst [vmem:[%s5 + $0x38] sm:$0xff] %v869
    %998 = vst [vmem:[%s5 + $0x40] sm:$0xff] %v884
    %999 = vst [vmem:[%s5 + $0x48] sm:$0xff] %v899
    %1000 = vst [vmem:[%s5 + $0x50] sm:$0xff] %v914
    %1001 = vst [vmem:[%s5 + $0x58] sm:$0xff] %v929
    %1002 = vst [vmem:[%s5 + $0x60] sm:$0xff] %v944
    %1003 = vst [vmem:[%s5 + $0x68] sm:$0xff] %v959
    %1004 = vst [vmem:[%s5 + $0x70] sm:$0xff] %v974
    %1005 = vst [vmem:[%s5 + $0x78] sm:$0xff] %v989
    %v1006 = vld [vmem:[%s4] sm:$0xff]
    %v1007 = vld [vmem:[%s4 + $0x8] sm:$0xff]
    %v1008 = vld [vmem:[%s4 + $0x10] sm:$0xff]
    %v1009 = vld [vmem:[%s4 + $0x18] sm:$0xff]
    %v1010 = vld [vmem:[%s4 + $0x20] sm:$0xff]
    %v1011 = vld [vmem:[%s4 + $0x28] sm:$0xff]
    %v1012 = vld [vmem:[%s4 + $0x30] sm:$0xff]
    %v1013 = vld [vmem:[%s4 + $0x38] sm:$0xff]
    %v1014 = vld [vmem:[%s4 + $0x40] sm:$0xff]
    %v1015 = vld [vmem:[%s4 + $0x48] sm:$0xff]
    %v1016 = vld [vmem:[%s4 + $0x50] sm:$0xff]
    %v1017 = vld [vmem:[%s4 + $0x58] sm:$0xff]
    %v1018 = vld [vmem:[%s4 + $0x60] sm:$0xff]
    %v1019 = vld [vmem:[%s4 + $0x68] sm:$0xff]
    %v1020 = vld [vmem:[%s4 + $0x70] sm:$0xff]
    %v1021 = vld [vmem:[%s4 + $0x78] sm:$0xff]
    %v1022 = vadd.f32 %v1006, %v764
    %v1023 = vadd.f32 %v1007, %v779
    %v1024 = vadd.f32 %v1008, %v794
    %v1025 = vadd.f32 %v1009, %v809
    %v1026 = vadd.f32 %v1010, %v824
    %v1027 = vadd.f32 %v1011, %v839
    %v1028 = vadd.f32 %v1012, %v854
    %v1029 = vadd.f32 %v1013, %v869
    %v1030 = vadd.f32 %v1014, %v884
    %v1031 = vadd.f32 %v1015, %v899
    %v1032 = vadd.f32 %v1016, %v914
    %v1033 = vadd.f32 %v1017, %v929
    %v1034 = vadd.f32 %v1018, %v944
    %v1035 = vadd.f32 %v1019, %v959
    %v1036 = vadd.f32 %v1020, %v974
    %v1037 = vadd.f32 %v1021, %v989
    %1038 = vst [vmem:[%s6] sm:$0xff] %v1022
    %1039 = vst [vmem:[%s6 + $0x8] sm:$0xff] %v1023
    %1040 = vst [vmem:[%s6 + $0x10] sm:$0xff] %v1024
    %1041 = vst [vmem:[%s6 + $0x18] sm:$0xff] %v1025
    %1042 = vst [vmem:[%s6 + $0x20] sm:$0xff] %v1026
    %1043 = vst [vmem:[%s6 + $0x28] sm:$0xff] %v1027
    %1044 = vst [vmem:[%s6 + $0x30] sm:$0xff] %v1028
    %1045 = vst [vmem:[%s6 + $0x38] sm:$0xff] %v1029
    %1046 = vst [vmem:[%s6 + $0x40] sm:$0xff] %v1030
    %1047 = vst [vmem:[%s6 + $0x48] sm:$0xff] %v1031
    %1048 = vst [vmem:[%s6 + $0x50] sm:$0xff] %v1032
    %1049 = vst [vmem:[%s6 + $0x58] sm:$0xff] %v1033
    %1050 = vst [vmem:[%s6 + $0x60] sm:$0xff] %v1034
    %1051 = vst [vmem:[%s6 + $0x68] sm:$0xff] %v1035
    %1052 = vst [vmem:[%s6 + $0x70] sm:$0xff] %v1036
    %1053 = vst [vmem:[%s6 + $0x78] sm:$0xff] %v1037
  $region29: #{hgdm_forward.8} parent=0 // pred_fallthru
    _
  // Predicated region
  $region30: #{hgdm_forward.8} parent=0 // pred_check
    _
  $region31: #{hgdm_forward.8} parent=0 // pred_check_branch
    %1055 = sbr.rel (0) target = $region33
  $region32: #{hgdm_forward.8} parent=0 // pred_region
    _
  $region33: #{hgdm_forward.8} parent=0 // pred_fallthru
    _
  // Predicated region
  $region34: #{hgdm_forward.8} parent=0 // pred_check
    _
  $region35: #{hgdm_forward.8} parent=0 // pred_check_branch
    %1057 = sbr.rel (0) target = $region37
  $region36: #{hgdm_forward.8} parent=0 // pred_region
    _
  $region37: #{hgdm_forward.8} parent=0 // pred_fallthru
    _
  // Predicated region
  $region38: #{hgdm_forward.8} parent=0 // pred_check
    _
  $region39: #{hgdm_forward.8} parent=0 // pred_check_branch
    %1059 = sbr.rel (0) target = $region41
  $region40: #{hgdm_forward.8} parent=0 // pred_region
    _
  $region41: #{hgdm_forward.8} parent=0 // pred_fallthru
    _
  // Predicated region
  $region42: #{hgdm_forward.8} parent=0 // pred_check
    _
  $region43: #{hgdm_forward.8} parent=0 // pred_check_branch
    %1061 = sbr.rel (0) target = $region45
  $region44: #{hgdm_forward.8} parent=0 // pred_region
    _
  $region45: #{hgdm_forward.8} parent=0 // pred_fallthru
    _

// kernel: hgdm_forward.9
$region0: #{hgdm_forward.9}
  #allocation0 [shape = 'u32[]', space=smem, size = 0x4, offset = 0x4, fixed_abs, tag = 'smem constant byte address 0x4 - core index']
  #allocation1 [shape = 'u32[72,128]{1,0:T(1,128)}', space=vmem, size = 0x9000, scoped, tag = 'internal scratch']
  #allocation2 [shape = 'f32[128,128]{1,0:T(8,128)}', space=vmem, size = 0x10000, scoped, tag = 'scratch operand']
  %s0 = inlined_call_operand.vmem [shape: bf16[128,128], index: 0, kind: input, shape index: {}]
  %s1 = inlined_call_operand.vmem [shape: f32[128,128], index: 1, kind: input, shape index: {}]
  %s2 = inlined_call_operand.vmem [shape: f32[128,1], index: 2, kind: input, shape index: {}]
  %s3 = inlined_call_operand.vmem [shape: f32[128,1], index: 3, kind: input, shape index: {}]
  %s4 = inlined_call_operand.vmem [shape: f32[128,128], index: 4, kind: input, shape index: {}]
  %s5 = inlined_call_operand.hbm [shape: f32[128,128], index: 5, kind: output, shape index: {0}]
  %s6 = inlined_call_operand.vmem [shape: f32[128,128], index: 6, kind: output, shape index: {1}]
  %7 = xla_tuple %s5, %s6
  %s8 = sld [smem:[#allocation0]]
  $region46: #{hgdm_forward.9} parent=0
    _
  %s10 = ssub.s32 1, %s8
  %s11 = scalar_select 0, %s10, %s8
  $region1: #{hgdm_forward.9} parent=0
    #allocation3 [shape = 'u8[65536]{0}', space=vmem, size = 0x10000, scoped, tag = 'output window, operand 0, single buffered']
    #allocation4 [shape = 's32[1]{0}', space=sflag, size = 0x4, scoped, tag = 'scoped memory for hgdm_forward.9']
    %12 = vsyncpa [#allocation4], 0
    // Predicated region
    $region2: #{hgdm_forward.9} parent=1 // pred_check
      _
    $region3: #{hgdm_forward.9} parent=1 // pred_check_branch
      %14 = sbr.rel (0) target = $region5
    $region4: #{hgdm_forward.9} parent=1 // pred_region
      _
    $region5: #{hgdm_forward.9} parent=1 // pred_fallthru
      _
    // Predicated region
    $region6: #{hgdm_forward.9} parent=1 // pred_check
      _
    $region7: #{hgdm_forward.9} parent=1 // pred_check_branch
      %16 = sbr.rel (0) target = $region9
    $region8: #{hgdm_forward.9} parent=1 // pred_region
      _
    $region9: #{hgdm_forward.9} parent=1 // pred_fallthru
      _
    // Predicated region
    $region10: #{hgdm_forward.9} parent=1 // pred_check
      _
    $region11: #{hgdm_forward.9} parent=1 // pred_check_branch
      %18 = sbr.rel (0) target = $region13
    $region12: #{hgdm_forward.9} parent=1 // pred_region
      _
    $region13: #{hgdm_forward.9} parent=1 // pred_fallthru
      _
    // Predicated region
    $region14: #{hgdm_forward.9} parent=1 // pred_check
      _
    $region15: #{hgdm_forward.9} parent=1 // pred_check_branch
      %20 = sbr.rel (0) target = $region17
    $region16: #{hgdm_forward.9} parent=1 // pred_region
      _
    $region17: #{hgdm_forward.9} parent=1 // pred_fallthru
      _
    // Predicated region
    $region18: #{hgdm_forward.9} parent=1 // pred_check
      _
    $region19: #{hgdm_forward.9} parent=1 // pred_check_branch
      %22 = sbr.rel (0) target = $region21
    $region20: #{hgdm_forward.9} parent=1 // pred_region
      _
    $region21: #{hgdm_forward.9} parent=1 // pred_fallthru
      _
    %p23 = scmp.eq.s32.totalorder 0, 0
    // Predicated region
    $region22: #{hgdm_forward.9} parent=1 // pred_check
      %p24 = pneg %p23
    $region23: #{hgdm_forward.9} parent=1 // pred_check_branch
      %26 = sbr.rel (%p24) target = $region25
    $region24: #{hgdm_forward.9} parent=1 // pred_region
      %27 = vst [vmem:[#allocation2] sm:$0xff] 0.0
      %28 = vst [vmem:[#allocation2 + $0x8] sm:$0xff] 0.0
      %29 = vst [vmem:[#allocation2 + $0x10] sm:$0xff] 0.0
      %30 = vst [vmem:[#allocation2 + $0x18] sm:$0xff] 0.0
      %31 = vst [vmem:[#allocation2 + $0x20] sm:$0xff] 0.0
      %32 = vst [vmem:[#allocation2 + $0x28] sm:$0xff] 0.0
      %33 = vst [vmem:[#allocation2 + $0x30] sm:$0xff] 0.0
      %34 = vst [vmem:[#allocation2 + $0x38] sm:$0xff] 0.0
      %35 = vst [vmem:[#allocation2 + $0x40] sm:$0xff] 0.0
      %36 = vst [vmem:[#allocation2 + $0x48] sm:$0xff] 0.0
      %37 = vst [vmem:[#allocation2 + $0x50] sm:$0xff] 0.0
      %38 = vst [vmem:[#allocation2 + $0x58] sm:$0xff] 0.0
      %39 = vst [vmem:[#allocation2 + $0x60] sm:$0xff] 0.0
      %40 = vst [vmem:[#allocation2 + $0x68] sm:$0xff] 0.0
      %41 = vst [vmem:[#allocation2 + $0x70] sm:$0xff] 0.0
      %42 = vst [vmem:[#allocation2 + $0x78] sm:$0xff] 0.0
    $region25: #{hgdm_forward.9} parent=1 // pred_fallthru
      _
    %v43 = vld [vmem:[%s1] sm:$0xff]
    %v44 = vld [vmem:[%s1 + $0x8] sm:$0xff]
    %v45 = vld [vmem:[%s1 + $0x10] sm:$0xff]
    %v46 = vld [vmem:[%s1 + $0x18] sm:$0xff]
    %v47 = vld [vmem:[%s1 + $0x20] sm:$0xff]
    %v48 = vld [vmem:[%s1 + $0x28] sm:$0xff]
    %v49 = vld [vmem:[%s1 + $0x30] sm:$0xff]
    %v50 = vld [vmem:[%s1 + $0x38] sm:$0xff]
    %v51 = vld [vmem:[%s1 + $0x40] sm:$0xff]
    %v52 = vld [vmem:[%s1 + $0x48] sm:$0xff]
    %v53 = vld [vmem:[%s1 + $0x50] sm:$0xff]
    %v54 = vld [vmem:[%s1 + $0x58] sm:$0xff]
    %v55 = vld [vmem:[%s1 + $0x60] sm:$0xff]
    %v56 = vld [vmem:[%s1 + $0x68] sm:$0xff]
    %v57 = vld [vmem:[%s1 + $0x70] sm:$0xff]
    %v58 = vld [vmem:[%s1 + $0x78] sm:$0xff]
    %v59 = vld [vmem:[%s2] sm:$0xff]
    %v60 = vld [vmem:[%s2 + $0x8] sm:$0xff]
    %v61 = vld [vmem:[%s2 + $0x10] sm:$0xff]
    %v62 = vld [vmem:[%s2 + $0x18] sm:$0xff]
    %v63 = vld [vmem:[%s2 + $0x20] sm:$0xff]
    %v64 = vld [vmem:[%s2 + $0x28] sm:$0xff]
    %v65 = vld [vmem:[%s2 + $0x30] sm:$0xff]
    %v66 = vld [vmem:[%s2 + $0x38] sm:$0xff]
    %v67 = vld [vmem:[%s2 + $0x40] sm:$0xff]
    %v68 = vld [vmem:[%s2 + $0x48] sm:$0xff]
    %v69 = vld [vmem:[%s2 + $0x50] sm:$0xff]
    %v70 = vld [vmem:[%s2 + $0x58] sm:$0xff]
    %v71 = vld [vmem:[%s2 + $0x60] sm:$0xff]
    %v72 = vld [vmem:[%s2 + $0x68] sm:$0xff]
    %v73 = vld [vmem:[%s2 + $0x70] sm:$0xff]
    %v74 = vld [vmem:[%s2 + $0x78] sm:$0xff]
    %76 = vset.pattern.permute.xlu0 0
    %77 = vperm.xlu0 %76, %v59
    %v78 = vpop.permute.xlu0 %77
    %81 = vset.pattern.permute.xlu0 0
    %82 = vperm.xlu0 %81, %v60
    %v83 = vpop.permute.xlu0 %82
    %86 = vset.pattern.permute.xlu0 0
    %87 = vperm.xlu0 %86, %v61
    %v88 = vpop.permute.xlu0 %87
    %91 = vset.pattern.permute.xlu0 0
    %92 = vperm.xlu0 %91, %v62
    %v93 = vpop.permute.xlu0 %92
    %96 = vset.pattern.permute.xlu0 0
    %97 = vperm.xlu0 %96, %v63
    %v98 = vpop.permute.xlu0 %97
    %101 = vset.pattern.permute.xlu0 0
    %102 = vperm.xlu0 %101, %v64
    %v103 = vpop.permute.xlu0 %102
    %106 = vset.pattern.permute.xlu0 0
    %107 = vperm.xlu0 %106, %v65
    %v108 = vpop.permute.xlu0 %107
    %111 = vset.pattern.permute.xlu0 0
    %112 = vperm.xlu0 %111, %v66
    %v113 = vpop.permute.xlu0 %112
    %116 = vset.pattern.permute.xlu0 0
    %117 = vperm.xlu0 %116, %v67
    %v118 = vpop.permute.xlu0 %117
    %121 = vset.pattern.permute.xlu0 0
    %122 = vperm.xlu0 %121, %v68
    %v123 = vpop.permute.xlu0 %122
    %126 = vset.pattern.permute.xlu0 0
    %127 = vperm.xlu0 %126, %v69
    %v128 = vpop.permute.xlu0 %127
    %131 = vset.pattern.permute.xlu0 0
    %132 = vperm.xlu0 %131, %v70
    %v133 = vpop.permute.xlu0 %132
    %136 = vset.pattern.permute.xlu0 0
    %137 = vperm.xlu0 %136, %v71
    %v138 = vpop.permute.xlu0 %137
    %141 = vset.pattern.permute.xlu0 0
    %142 = vperm.xlu0 %141, %v72
    %v143 = vpop.permute.xlu0 %142
    %146 = vset.pattern.permute.xlu0 0
    %147 = vperm.xlu0 %146, %v73
    %v148 = vpop.permute.xlu0 %147
    %151 = vset.pattern.permute.xlu0 0
    %152 = vperm.xlu0 %151, %v74
    %v153 = vpop.permute.xlu0 %152
    %v155 = vmul.f32 %v43, %v78
    %v156 = vmul.f32 %v44, %v83
    %v157 = vmul.f32 %v45, %v88
    %v158 = vmul.f32 %v46, %v93
    %v159 = vmul.f32 %v47, %v98
    %v160 = vmul.f32 %v48, %v103
    %v161 = vmul.f32 %v49, %v108
    %v162 = vmul.f32 %v50, %v113
    %v163 = vmul.f32 %v51, %v118
    %v164 = vmul.f32 %v52, %v123
    %v165 = vmul.f32 %v53, %v128
    %v166 = vmul.f32 %v54, %v133
    %v167 = vmul.f32 %v55, %v138
    %v168 = vmul.f32 %v56, %v143
    %v169 = vmul.f32 %v57, %v148
    %v170 = vmul.f32 %v58, %v153
    %v171 = vld [vmem:[%s0] sm:$0xf]
    %v172 = vld [vmem:[%s0 + $0x4] sm:$0xf]
    %v173 = vld [vmem:[%s0 + $0x8] sm:$0xf]
    %v174 = vld [vmem:[%s0 + $0xc] sm:$0xf]
    %v175 = vld [vmem:[%s0 + $0x10] sm:$0xf]
    %v176 = vld [vmem:[%s0 + $0x14] sm:$0xf]
    %v177 = vld [vmem:[%s0 + $0x18] sm:$0xf]
    %v178 = vld [vmem:[%s0 + $0x1c] sm:$0xf]
    %v179 = vld [vmem:[%s0 + $0x20] sm:$0xf]
    %v180 = vld [vmem:[%s0 + $0x24] sm:$0xf]
    %v181 = vld [vmem:[%s0 + $0x28] sm:$0xf]
    %v182 = vld [vmem:[%s0 + $0x2c] sm:$0xf]
    %v183 = vld [vmem:[%s0 + $0x30] sm:$0xf]
    %v184 = vld [vmem:[%s0 + $0x34] sm:$0xf]
    %v185 = vld [vmem:[%s0 + $0x38] sm:$0xf]
    %v186 = vld [vmem:[%s0 + $0x3c] sm:$0xf]
    %v187 = vunpack.c.l.bf16 %v171
    %v188 = vunpack.c.l.bf16 %v172
    %v189 = vunpack.c.l.bf16 %v173
    %v190 = vunpack.c.l.bf16 %v174
    %v191 = vunpack.c.l.bf16 %v175
    %v192 = vunpack.c.l.bf16 %v176
    %v193 = vunpack.c.l.bf16 %v177
    %v194 = vunpack.c.l.bf16 %v178
    %v195 = vunpack.c.l.bf16 %v179
    %v196 = vunpack.c.l.bf16 %v180
    %v197 = vunpack.c.l.bf16 %v181
    %v198 = vunpack.c.l.bf16 %v182
    %v199 = vunpack.c.l.bf16 %v183
    %v200 = vunpack.c.l.bf16 %v184
    %v201 = vunpack.c.l.bf16 %v185
    %v202 = vunpack.c.l.bf16 %v186
    %v203 = vld [vmem:[#allocation2] sm:$0xff]
    %v204 = vld [vmem:[#allocation2 + $0x8] sm:$0xff]
    %v205 = vld [vmem:[#allocation2 + $0x10] sm:$0xff]
    %v206 = vld [vmem:[#allocation2 + $0x18] sm:$0xff]
    %v207 = vld [vmem:[#allocation2 + $0x20] sm:$0xff]
    %v208 = vld [vmem:[#allocation2 + $0x28] sm:$0xff]
    %v209 = vld [vmem:[#allocation2 + $0x30] sm:$0xff]
    %v210 = vld [vmem:[#allocation2 + $0x38] sm:$0xff]
    %v211 = vld [vmem:[#allocation2 + $0x40] sm:$0xff]
    %v212 = vld [vmem:[#allocation2 + $0x48] sm:$0xff]
    %v213 = vld [vmem:[#allocation2 + $0x50] sm:$0xff]
    %v214 = vld [vmem:[#allocation2 + $0x58] sm:$0xff]
    %v215 = vld [vmem:[#allocation2 + $0x60] sm:$0xff]
    %v216 = vld [vmem:[#allocation2 + $0x68] sm:$0xff]
    %v217 = vld [vmem:[#allocation2 + $0x70] sm:$0xff]
    %v218 = vld [vmem:[#allocation2 + $0x78] sm:$0xff]
    %219 = vmatpush.msra.mxu0 %v170
    %220 = vmatpush.msra.mxu0 %v169
    %221 = vmatpush.msra.mxu0 %v168
    %222 = vmatpush.msra.mxu0 %v167
    %223 = vmatpush.msra.mxu0 %v166
    %224 = vmatpush.msra.mxu0 %v165
    %225 = vmatpush.msra.mxu0 %v164
    %226 = vmatpush.msra.mxu0 %v163
    %227 = vmatpush.msra.mxu0 %v162
    %228 = vmatpush.msra.mxu0 %v161
    %229 = vmatpush.msra.mxu0 %v160
    %230 = vmatpush.msra.mxu0 %v159
    %231 = vmatpush.msra.mxu0 %v158
    %232 = vmatpush.msra.mxu0 %v157
    %233 = vmatpush.msra.mxu0 %v156
    %234 = vmatpush.msra.mxu0 %v155
    %235 = vmatmul.f32.gmra.mxu0 %v187
    %v236 = vpop.f32.mrf.mxu0
    %v237 = vadd.f32 0.0, %v236
    %238 = vmatmul.f32.gmra.mxu0 %v188
    %v239 = vpop.f32.mrf.mxu0
    %v240 = vadd.f32 0.0, %v239
    %241 = vmatmul.f32.gmra.mxu0 %v189
    %v242 = vpop.f32.mrf.mxu0
    %v243 = vadd.f32 0.0, %v242
    %244 = vmatmul.f32.gmra.mxu0 %v190
    %v245 = vpop.f32.mrf.mxu0
    %v246 = vadd.f32 0.0, %v245
    %247 = vmatmul.f32.gmra.mxu0 %v191
    %v248 = vpop.f32.mrf.mxu0
    %v249 = vadd.f32 0.0, %v248
    %250 = vmatmul.f32.gmra.mxu0 %v192
    %v251 = vpop.f32.mrf.mxu0
    %v252 = vadd.f32 0.0, %v251
    %253 = vmatmul.f32.gmra.mxu0 %v193
    %v254 = vpop.f32.mrf.mxu0
    %v255 = vadd.f32 0.0, %v254
    %256 = vmatmul.f32.gmra.mxu0 %v194
    %v257 = vpop.f32.mrf.mxu0
    %v258 = vadd.f32 0.0, %v257
    %259 = vmatmul.f32.gmra.mxu0 %v195
    %v260 = vpop.f32.mrf.mxu0
    %v261 = vadd.f32 0.0, %v260
    %262 = vmatmul.f32.gmra.mxu0 %v196
    %v263 = vpop.f32.mrf.mxu0
    %v264 = vadd.f32 0.0, %v263
    %265 = vmatmul.f32.gmra.mxu0 %v197
    %v266 = vpop.f32.mrf.mxu0
    %v267 = vadd.f32 0.0, %v266
    %268 = vmatmul.f32.gmra.mxu0 %v198
    %v269 = vpop.f32.mrf.mxu0
    %v270 = vadd.f32 0.0, %v269
    %271 = vmatmul.f32.gmra.mxu0 %v199
    %v272 = vpop.f32.mrf.mxu0
    %v273 = vadd.f32 0.0, %v272
    %274 = vmatmul.f32.gmra.mxu0 %v200
    %v275 = vpop.f32.mrf.mxu0
    %v276 = vadd.f32 0.0, %v275
    %277 = vmatmul.f32.gmra.mxu0 %v201
    %v278 = vpop.f32.mrf.mxu0
    %v279 = vadd.f32 0.0, %v278
    %280 = vmatmul.f32.gmra.mxu0 %v202
    %v281 = vpop.f32.mrf.mxu0
    %v282 = vadd.f32 0.0, %v281
    %283 = vdwg.mxu0
    %v284 = vadd.f32 %v203, %v237
    %v285 = vadd.f32 %v204, %v240
    %v286 = vadd.f32 %v205, %v243
    %v287 = vadd.f32 %v206, %v246
    %v288 = vadd.f32 %v207, %v249
    %v289 = vadd.f32 %v208, %v252
    %v290 = vadd.f32 %v209, %v255
    %v291 = vadd.f32 %v210, %v258
    %v292 = vadd.f32 %v211, %v261
    %v293 = vadd.f32 %v212, %v264
    %v294 = vadd.f32 %v213, %v267
    %v295 = vadd.f32 %v214, %v270
    %v296 = vadd.f32 %v215, %v273
    %v297 = vadd.f32 %v216, %v276
    %v298 = vadd.f32 %v217, %v279
    %v299 = vadd.f32 %v218, %v282
    %300 = vst [vmem:[#allocation2] sm:$0xff] %v284
    %301 = vst [vmem:[#allocation2 + $0x8] sm:$0xff] %v285
    %302 = vst [vmem:[#allocation2 + $0x10] sm:$0xff] %v286
    %303 = vst [vmem:[#allocation2 + $0x18] sm:$0xff] %v287
    %304 = vst [vmem:[#allocation2 + $0x20] sm:$0xff] %v288
    %305 = vst [vmem:[#allocation2 + $0x28] sm:$0xff] %v289
    %306 = vst [vmem:[#allocation2 + $0x30] sm:$0xff] %v290
    %307 = vst [vmem:[#allocation2 + $0x38] sm:$0xff] %v291
    %308 = vst [vmem:[#allocation2 + $0x40] sm:$0xff] %v292
    %309 = vst [vmem:[#allocation2 + $0x48] sm:$0xff] %v293
    %310 = vst [vmem:[#allocation2 + $0x50] sm:$0xff] %v294
    %311 = vst [vmem:[#allocation2 + $0x58] sm:$0xff] %v295
    %312 = vst [vmem:[#allocation2 + $0x60] sm:$0xff] %v296
    %313 = vst [vmem:[#allocation2 + $0x68] sm:$0xff] %v297
    %314 = vst [vmem:[#allocation2 + $0x70] sm:$0xff] %v298
    %315 = vst [vmem:[#allocation2 + $0x78] sm:$0xff] %v299
    // Predicated region
    $region26: #{hgdm_forward.9} parent=1 // pred_check
      %p316 = pneg %p23
    $region27: #{hgdm_forward.9} parent=1 // pred_check_branch
      %318 = sbr.rel (%p316) target = $region29
    $region28: #{hgdm_forward.9} parent=1 // pred_region
      %v319 = vld [vmem:[#allocation2] sm:$0xff]
      %v320 = vld [vmem:[#allocation2 + $0x8] sm:$0xff]
      %v321 = vld [vmem:[#allocation2 + $0x10] sm:$0xff]
      %v322 = vld [vmem:[#allocation2 + $0x18] sm:$0xff]
      %v323 = vld [vmem:[#allocation2 + $0x20] sm:$0xff]
      %v324 = vld [vmem:[#allocation2 + $0x28] sm:$0xff]
      %v325 = vld [vmem:[#allocation2 + $0x30] sm:$0xff]
      %v326 = vld [vmem:[#allocation2 + $0x38] sm:$0xff]
      %v327 = vld [vmem:[#allocation2 + $0x40] sm:$0xff]
      %v328 = vld [vmem:[#allocation2 + $0x48] sm:$0xff]
      %v329 = vld [vmem:[#allocation2 + $0x50] sm:$0xff]
      %v330 = vld [vmem:[#allocation2 + $0x58] sm:$0xff]
      %v331 = vld [vmem:[#allocation2 + $0x60] sm:$0xff]
      %v332 = vld [vmem:[#allocation2 + $0x68] sm:$0xff]
      %v333 = vld [vmem:[#allocation2 + $0x70] sm:$0xff]
      %v334 = vld [vmem:[#allocation2 + $0x78] sm:$0xff]
      %v335 = vld [vmem:[%s3] sm:$0xff]
      %v336 = vld [vmem:[%s3 + $0x8] sm:$0xff]
      %v337 = vld [vmem:[%s3 + $0x10] sm:$0xff]
      %v338 = vld [vmem:[%s3 + $0x18] sm:$0xff]
      %v339 = vld [vmem:[%s3 + $0x20] sm:$0xff]
      %v340 = vld [vmem:[%s3 + $0x28] sm:$0xff]
      %v341 = vld [vmem:[%s3 + $0x30] sm:$0xff]
      %v342 = vld [vmem:[%s3 + $0x38] sm:$0xff]
      %v343 = vld [vmem:[%s3 + $0x40] sm:$0xff]
      %v344 = vld [vmem:[%s3 + $0x48] sm:$0xff]
      %v345 = vld [vmem:[%s3 + $0x50] sm:$0xff]
      %v346 = vld [vmem:[%s3 + $0x58] sm:$0xff]
      %v347 = vld [vmem:[%s3 + $0x60] sm:$0xff]
      %v348 = vld [vmem:[%s3 + $0x68] sm:$0xff]
      %v349 = vld [vmem:[%s3 + $0x70] sm:$0xff]
      %v350 = vld [vmem:[%s3 + $0x78] sm:$0xff]
      %352 = vset.pattern.permute.xlu0 0
      %353 = vperm.xlu0 %352, %v335
      %v354 = vpop.permute.xlu0 %353
      %357 = vset.pattern.permute.xlu0 0
      %358 = vperm.xlu0 %357, %v336
      %v359 = vpop.permute.xlu0 %358
      %362 = vset.pattern.permute.xlu0 0
      %363 = vperm.xlu0 %362, %v337
      %v364 = vpop.permute.xlu0 %363
      %367 = vset.pattern.permute.xlu0 0
      %368 = vperm.xlu0 %367, %v338
      %v369 = vpop.permute.xlu0 %368
      %372 = vset.pattern.permute.xlu0 0
      %373 = vperm.xlu0 %372, %v339
      %v374 = vpop.permute.xlu0 %373
      %377 = vset.pattern.permute.xlu0 0
      %378 = vperm.xlu0 %377, %v340
      %v379 = vpop.permute.xlu0 %378
      %382 = vset.pattern.permute.xlu0 0
      %383 = vperm.xlu0 %382, %v341
      %v384 = vpop.permute.xlu0 %383
      %387 = vset.pattern.permute.xlu0 0
      %388 = vperm.xlu0 %387, %v342
      %v389 = vpop.permute.xlu0 %388
      %392 = vset.pattern.permute.xlu0 0
      %393 = vperm.xlu0 %392, %v343
      %v394 = vpop.permute.xlu0 %393
      %397 = vset.pattern.permute.xlu0 0
      %398 = vperm.xlu0 %397, %v344
      %v399 = vpop.permute.xlu0 %398
      %402 = vset.pattern.permute.xlu0 0
      %403 = vperm.xlu0 %402, %v345
      %v404 = vpop.permute.xlu0 %403
      %407 = vset.pattern.permute.xlu0 0
      %408 = vperm.xlu0 %407, %v346
      %v409 = vpop.permute.xlu0 %408
      %412 = vset.pattern.permute.xlu0 0
      %413 = vperm.xlu0 %412, %v347
      %v414 = vpop.permute.xlu0 %413
      %417 = vset.pattern.permute.xlu0 0
      %418 = vperm.xlu0 %417, %v348
      %v419 = vpop.permute.xlu0 %418
      %422 = vset.pattern.permute.xlu0 0
      %423 = vperm.xlu0 %422, %v349
      %v424 = vpop.permute.xlu0 %423
      %427 = vset.pattern.permute.xlu0 0
      %428 = vperm.xlu0 %427, %v350
      %v429 = vpop.permute.xlu0 %428
      %v431 = vmul.f32 %v319, %v354
      %v432 = vmul.f32 %v320, %v359
      %v433 = vmul.f32 %v321, %v364
      %v434 = vmul.f32 %v322, %v369
      %v435 = vmul.f32 %v323, %v374
      %v436 = vmul.f32 %v324, %v379
      %v437 = vmul.f32 %v325, %v384
      %v438 = vmul.f32 %v326, %v389
      %v439 = vmul.f32 %v327, %v394
      %v440 = vmul.f32 %v328, %v399
      %v441 = vmul.f32 %v329, %v404
      %v442 = vmul.f32 %v330, %v409
      %v443 = vmul.f32 %v331, %v414
      %v444 = vmul.f32 %v332, %v419
      %v445 = vmul.f32 %v333, %v424
      %v446 = vmul.f32 %v334, %v429
      %vm447 = vcmp.ge.f32.partialorder %v431, 0.0
      %vm448 = vcmp.ge.f32.partialorder %v432, 0.0
      %vm449 = vcmp.ge.f32.partialorder %v433, 0.0
      %vm450 = vcmp.ge.f32.partialorder %v434, 0.0
      %vm451 = vcmp.ge.f32.partialorder %v435, 0.0
      %vm452 = vcmp.ge.f32.partialorder %v436, 0.0
      %vm453 = vcmp.ge.f32.partialorder %v437, 0.0
      %vm454 = vcmp.ge.f32.partialorder %v438, 0.0
      %vm455 = vcmp.ge.f32.partialorder %v439, 0.0
      %vm456 = vcmp.ge.f32.partialorder %v440, 0.0
      %vm457 = vcmp.ge.f32.partialorder %v441, 0.0
      %vm458 = vcmp.ge.f32.partialorder %v442, 0.0
      %vm459 = vcmp.ge.f32.partialorder %v443, 0.0
      %vm460 = vcmp.ge.f32.partialorder %v444, 0.0
      %vm461 = vcmp.ge.f32.partialorder %v445, 0.0
      %vm462 = vcmp.ge.f32.partialorder %v446, 0.0
      %v463 = vmul.f32 %v431, 0.5
      %v464 = vmul.f32 %v432, 0.5
      %v465 = vmul.f32 %v433, 0.5
      %v466 = vmul.f32 %v434, 0.5
      %v467 = vmul.f32 %v435, 0.5
      %v468 = vmul.f32 %v436, 0.5
      %v469 = vmul.f32 %v437, 0.5
      %v470 = vmul.f32 %v438, 0.5
      %v471 = vmul.f32 %v439, 0.5
      %v472 = vmul.f32 %v440, 0.5
      %v473 = vmul.f32 %v441, 0.5
      %v474 = vmul.f32 %v442, 0.5
      %v475 = vmul.f32 %v443, 0.5
      %v476 = vmul.f32 %v444, 0.5
      %v477 = vmul.f32 %v445, 0.5
      %v478 = vmul.f32 %v446, 0.5
      %v479 = vsel %vm447, %v431, %v463
      %v480 = vsel %vm448, %v432, %v464
      %v481 = vsel %vm449, %v433, %v465
      %v482 = vsel %vm450, %v434, %v466
      %v483 = vsel %vm451, %v435, %v467
      %v484 = vsel %vm452, %v436, %v468
      %v485 = vsel %vm453, %v437, %v469
      %v486 = vsel %vm454, %v438, %v470
      %v487 = vsel %vm455, %v439, %v471
      %v488 = vsel %vm456, %v440, %v472
      %v489 = vsel %vm457, %v441, %v473
      %v490 = vsel %vm458, %v442, %v474
      %v491 = vsel %vm459, %v443, %v475
      %v492 = vsel %vm460, %v444, %v476
      %v493 = vsel %vm461, %v445, %v477
      %v494 = vsel %vm462, %v446, %v478
      %v495 = vmul.f32 %v479, %v479
      %v496 = vmul.f32 %v480, %v480
      %v497 = vmul.f32 %v481, %v481
      %v498 = vmul.f32 %v482, %v482
      %v499 = vmul.f32 %v483, %v483
      %v500 = vmul.f32 %v484, %v484
      %v501 = vmul.f32 %v485, %v485
      %v502 = vmul.f32 %v486, %v486
      %v503 = vmul.f32 %v487, %v487
      %v504 = vmul.f32 %v488, %v488
      %v505 = vmul.f32 %v489, %v489
      %v506 = vmul.f32 %v490, %v490
      %v507 = vmul.f32 %v491, %v491
      %v508 = vmul.f32 %v492, %v492
      %v509 = vmul.f32 %v493, %v493
      %v510 = vmul.f32 %v494, %v494
      %511 = vadd.xlane.f32.xlu0 %v495
      %v512 = vpop.xlane.xlu0 %511
      %513 = vadd.xlane.f32.xlu0 %v496
      %v514 = vpop.xlane.xlu0 %513
      %515 = vadd.xlane.f32.xlu0 %v497
      %v516 = vpop.xlane.xlu0 %515
      %517 = vadd.xlane.f32.xlu0 %v498
      %v518 = vpop.xlane.xlu0 %517
      %519 = vadd.xlane.f32.xlu0 %v499
      %v520 = vpop.xlane.xlu0 %519
      %521 = vadd.xlane.f32.xlu0 %v500
      %v522 = vpop.xlane.xlu0 %521
      %523 = vadd.xlane.f32.xlu0 %v501
      %v524 = vpop.xlane.xlu0 %523
      %525 = vadd.xlane.f32.xlu0 %v502
      %v526 = vpop.xlane.xlu0 %525
      %527 = vadd.xlane.f32.xlu0 %v503
      %v528 = vpop.xlane.xlu0 %527
      %529 = vadd.xlane.f32.xlu0 %v504
      %v530 = vpop.xlane.xlu0 %529
      %531 = vadd.xlane.f32.xlu0 %v505
      %v532 = vpop.xlane.xlu0 %531
      %533 = vadd.xlane.f32.xlu0 %v506
      %v534 = vpop.xlane.xlu0 %533
      %535 = vadd.xlane.f32.xlu0 %v507
      %v536 = vpop.xlane.xlu0 %535
      %537 = vadd.xlane.f32.xlu0 %v508
      %v538 = vpop.xlane.xlu0 %537
      %539 = vadd.xlane.f32.xlu0 %v509
      %v540 = vpop.xlane.xlu0 %539
      %541 = vadd.xlane.f32.xlu0 %v510
      %v542 = vpop.xlane.xlu0 %541
      %v543 = vrsqrt.pop %v512
      %v544 = vmul.f32 %v543, %v512
      %v545 = vmul.f32 %v544, %v543
      %v546 = vmul.f32 0.5, %v545
      %v547 = vsub.f32 1.5, %v546
      %v548 = vmul.f32 %v543, %v547
      %v549 = vmul.f32 %v512, %v548
      %vm550 = vcmp.eq.f32.partialorder %v512, inf
      %v551 = vsel %vm550, %v512, %v549
      %vm552 = vcmp.eq.f32.partialorder %v512, 0.0
      %v553 = vand.u32 %v512, 2147483648
      %v554 = vsel %vm552, %v553, %v551
      %v555 = vrsqrt.pop %v514
      %v556 = vmul.f32 %v555, %v514
      %v557 = vmul.f32 %v556, %v555
      %v558 = vmul.f32 0.5, %v557
      %v559 = vsub.f32 1.5, %v558
      %v560 = vmul.f32 %v555, %v559
      %v561 = vmul.f32 %v514, %v560
      %vm562 = vcmp.eq.f32.partialorder %v514, inf
      %v563 = vsel %vm562, %v514, %v561
      %vm564 = vcmp.eq.f32.partialorder %v514, 0.0
      %v565 = vand.u32 %v514, 2147483648
      %v566 = vsel %vm564, %v565, %v563
      %v567 = vrsqrt.pop %v516
      %v568 = vmul.f32 %v567, %v516
      %v569 = vmul.f32 %v568, %v567
      %v570 = vmul.f32 0.5, %v569
      %v571 = vsub.f32 1.5, %v570
      %v572 = vmul.f32 %v567, %v571
      %v573 = vmul.f32 %v516, %v572
      %vm574 = vcmp.eq.f32.partialorder %v516, inf
      %v575 = vsel %vm574, %v516, %v573
      %vm576 = vcmp.eq.f32.partialorder %v516, 0.0
      %v577 = vand.u32 %v516, 2147483648
      %v578 = vsel %vm576, %v577, %v575
      %v579 = vrsqrt.pop %v518
      %v580 = vmul.f32 %v579, %v518
      %v581 = vmul.f32 %v580, %v579
      %v582 = vmul.f32 0.5, %v581
      %v583 = vsub.f32 1.5, %v582
      %v584 = vmul.f32 %v579, %v583
      %v585 = vmul.f32 %v518, %v584
      %vm586 = vcmp.eq.f32.partialorder %v518, inf
      %v587 = vsel %vm586, %v518, %v585
      %vm588 = vcmp.eq.f32.partialorder %v518, 0.0
      %v589 = vand.u32 %v518, 2147483648
      %v590 = vsel %vm588, %v589, %v587
      %v591 = vrsqrt.pop %v520
      %v592 = vmul.f32 %v591, %v520
      %v593 = vmul.f32 %v592, %v591
      %v594 = vmul.f32 0.5, %v593
      %v595 = vsub.f32 1.5, %v594
      %v596 = vmul.f32 %v591, %v595
      %v597 = vmul.f32 %v520, %v596
      %vm598 = vcmp.eq.f32.partialorder %v520, inf
      %v599 = vsel %vm598, %v520, %v597
      %vm600 = vcmp.eq.f32.partialorder %v520, 0.0
      %v601 = vand.u32 %v520, 2147483648
      %v602 = vsel %vm600, %v601, %v599
      %v603 = vrsqrt.pop %v522
      %v604 = vmul.f32 %v603, %v522
      %v605 = vmul.f32 %v604, %v603
      %v606 = vmul.f32 0.5, %v605
      %v607 = vsub.f32 1.5, %v606
      %v608 = vmul.f32 %v603, %v607
      %v609 = vmul.f32 %v522, %v608
      %vm610 = vcmp.eq.f32.partialorder %v522, inf
      %v611 = vsel %vm610, %v522, %v609
      %vm612 = vcmp.eq.f32.partialorder %v522, 0.0
      %v613 = vand.u32 %v522, 2147483648
      %v614 = vsel %vm612, %v613, %v611
      %v615 = vrsqrt.pop %v524
      %v616 = vmul.f32 %v615, %v524
      %v617 = vmul.f32 %v616, %v615
      %v618 = vmul.f32 0.5, %v617
      %v619 = vsub.f32 1.5, %v618
      %v620 = vmul.f32 %v615, %v619
      %v621 = vmul.f32 %v524, %v620
      %vm622 = vcmp.eq.f32.partialorder %v524, inf
      %v623 = vsel %vm622, %v524, %v621
      %vm624 = vcmp.eq.f32.partialorder %v524, 0.0
      %v625 = vand.u32 %v524, 2147483648
      %v626 = vsel %vm624, %v625, %v623
      %v627 = vrsqrt.pop %v526
      %v628 = vmul.f32 %v627, %v526
      %v629 = vmul.f32 %v628, %v627
      %v630 = vmul.f32 0.5, %v629
      %v631 = vsub.f32 1.5, %v630
      %v632 = vmul.f32 %v627, %v631
      %v633 = vmul.f32 %v526, %v632
      %vm634 = vcmp.eq.f32.partialorder %v526, inf
      %v635 = vsel %vm634, %v526, %v633
      %vm636 = vcmp.eq.f32.partialorder %v526, 0.0
      %v637 = vand.u32 %v526, 2147483648
      %v638 = vsel %vm636, %v637, %v635
      %v639 = vrsqrt.pop %v528
      %v640 = vmul.f32 %v639, %v528
      %v641 = vmul.f32 %v640, %v639
      %v642 = vmul.f32 0.5, %v641
      %v643 = vsub.f32 1.5, %v642
      %v644 = vmul.f32 %v639, %v643
      %v645 = vmul.f32 %v528, %v644
      %vm646 = vcmp.eq.f32.partialorder %v528, inf
      %v647 = vsel %vm646, %v528, %v645
      %vm648 = vcmp.eq.f32.partialorder %v528, 0.0
      %v649 = vand.u32 %v528, 2147483648
      %v650 = vsel %vm648, %v649, %v647
      %v651 = vrsqrt.pop %v530
      %v652 = vmul.f32 %v651, %v530
      %v653 = vmul.f32 %v652, %v651
      %v654 = vmul.f32 0.5, %v653
      %v655 = vsub.f32 1.5, %v654
      %v656 = vmul.f32 %v651, %v655
      %v657 = vmul.f32 %v530, %v656
      %vm658 = vcmp.eq.f32.partialorder %v530, inf
      %v659 = vsel %vm658, %v530, %v657
      %vm660 = vcmp.eq.f32.partialorder %v530, 0.0
      %v661 = vand.u32 %v530, 2147483648
      %v662 = vsel %vm660, %v661, %v659
      %v663 = vrsqrt.pop %v532
      %v664 = vmul.f32 %v663, %v532
      %v665 = vmul.f32 %v664, %v663
      %v666 = vmul.f32 0.5, %v665
      %v667 = vsub.f32 1.5, %v666
      %v668 = vmul.f32 %v663, %v667
      %v669 = vmul.f32 %v532, %v668
      %vm670 = vcmp.eq.f32.partialorder %v532, inf
      %v671 = vsel %vm670, %v532, %v669
      %vm672 = vcmp.eq.f32.partialorder %v532, 0.0
      %v673 = vand.u32 %v532, 2147483648
      %v674 = vsel %vm672, %v673, %v671
      %v675 = vrsqrt.pop %v534
      %v676 = vmul.f32 %v675, %v534
      %v677 = vmul.f32 %v676, %v675
      %v678 = vmul.f32 0.5, %v677
      %v679 = vsub.f32 1.5, %v678
      %v680 = vmul.f32 %v675, %v679
      %v681 = vmul.f32 %v534, %v680
      %vm682 = vcmp.eq.f32.partialorder %v534, inf
      %v683 = vsel %vm682, %v534, %v681
      %vm684 = vcmp.eq.f32.partialorder %v534, 0.0
      %v685 = vand.u32 %v534, 2147483648
      %v686 = vsel %vm684, %v685, %v683
      %v687 = vrsqrt.pop %v536
      %v688 = vmul.f32 %v687, %v536
      %v689 = vmul.f32 %v688, %v687
      %v690 = vmul.f32 0.5, %v689
      %v691 = vsub.f32 1.5, %v690
      %v692 = vmul.f32 %v687, %v691
      %v693 = vmul.f32 %v536, %v692
      %vm694 = vcmp.eq.f32.partialorder %v536, inf
      %v695 = vsel %vm694, %v536, %v693
      %vm696 = vcmp.eq.f32.partialorder %v536, 0.0
      %v697 = vand.u32 %v536, 2147483648
      %v698 = vsel %vm696, %v697, %v695
      %v699 = vrsqrt.pop %v538
      %v700 = vmul.f32 %v699, %v538
      %v701 = vmul.f32 %v700, %v699
      %v702 = vmul.f32 0.5, %v701
      %v703 = vsub.f32 1.5, %v702
      %v704 = vmul.f32 %v699, %v703
      %v705 = vmul.f32 %v538, %v704
      %vm706 = vcmp.eq.f32.partialorder %v538, inf
      %v707 = vsel %vm706, %v538, %v705
      %vm708 = vcmp.eq.f32.partialorder %v538, 0.0
      %v709 = vand.u32 %v538, 2147483648
      %v710 = vsel %vm708, %v709, %v707
      %v711 = vrsqrt.pop %v540
      %v712 = vmul.f32 %v711, %v540
      %v713 = vmul.f32 %v712, %v711
      %v714 = vmul.f32 0.5, %v713
      %v715 = vsub.f32 1.5, %v714
      %v716 = vmul.f32 %v711, %v715
      %v717 = vmul.f32 %v540, %v716
      %vm718 = vcmp.eq.f32.partialorder %v540, inf
      %v719 = vsel %vm718, %v540, %v717
      %vm720 = vcmp.eq.f32.partialorder %v540, 0.0
      %v721 = vand.u32 %v540, 2147483648
      %v722 = vsel %vm720, %v721, %v719
      %v723 = vrsqrt.pop %v542
      %v724 = vmul.f32 %v723, %v542
      %v725 = vmul.f32 %v724, %v723
      %v726 = vmul.f32 0.5, %v725
      %v727 = vsub.f32 1.5, %v726
      %v728 = vmul.f32 %v723, %v727
      %v729 = vmul.f32 %v542, %v728
      %vm730 = vcmp.eq.f32.partialorder %v542, inf
      %v731 = vsel %vm730, %v542, %v729
      %vm732 = vcmp.eq.f32.partialorder %v542, 0.0
      %v733 = vand.u32 %v542, 2147483648
      %v734 = vsel %vm732, %v733, %v731
      %v735 = vmax.f32 %v554, 1e-12
      %v736 = vmax.f32 %v566, 1e-12
      %v737 = vmax.f32 %v578, 1e-12
      %v738 = vmax.f32 %v590, 1e-12
      %v739 = vmax.f32 %v602, 1e-12
      %v740 = vmax.f32 %v614, 1e-12
      %v741 = vmax.f32 %v626, 1e-12
      %v742 = vmax.f32 %v638, 1e-12
      %v743 = vmax.f32 %v650, 1e-12
      %v744 = vmax.f32 %v662, 1e-12
      %v745 = vmax.f32 %v674, 1e-12
      %v746 = vmax.f32 %v686, 1e-12
      %v747 = vmax.f32 %v698, 1e-12
      %v748 = vmax.f32 %v710, 1e-12
      %v749 = vmax.f32 %v722, 1e-12
      %v750 = vmax.f32 %v734, 1e-12
      %v751 = vrcp.pop %v735
      %v752 = vmul.f32 %v735, %v751
      %v753 = vsub.f32 1.0, %v752
      %v754 = vmul.f32 %v751, %v753
      %v755 = vadd.f32 %v751, %v754
      %vm756 = vweird.f32 %v735
      %vm757 = vweird.f32 %v751
      %vm758 = vmor %vm756, %vm757
      %v759 = vsel %vm758, %v751, %v755
      %v760 = vand.u32 2147483647, %v735
      %vm761 = vcmp.eq.f32.partialorder %v760, 8.507059e+37
      %v762 = vand.u32 %v735, 2147483648
      %v763 = vor.u32 1.1754944e-38, %v762
      %v764 = vsel %vm761, %v763, %v759
      %v765 = vmul.f32 %v479, %v764
      %v766 = vrcp.pop %v736
      %v767 = vmul.f32 %v736, %v766
      %v768 = vsub.f32 1.0, %v767
      %v769 = vmul.f32 %v766, %v768
      %v770 = vadd.f32 %v766, %v769
      %vm771 = vweird.f32 %v736
      %vm772 = vweird.f32 %v766
      %vm773 = vmor %vm771, %vm772
      %v774 = vsel %vm773, %v766, %v770
      %v775 = vand.u32 2147483647, %v736
      %vm776 = vcmp.eq.f32.partialorder %v775, 8.507059e+37
      %v777 = vand.u32 %v736, 2147483648
      %v778 = vor.u32 1.1754944e-38, %v777
      %v779 = vsel %vm776, %v778, %v774
      %v780 = vmul.f32 %v480, %v779
      %v781 = vrcp.pop %v737
      %v782 = vmul.f32 %v737, %v781
      %v783 = vsub.f32 1.0, %v782
      %v784 = vmul.f32 %v781, %v783
      %v785 = vadd.f32 %v781, %v784
      %vm786 = vweird.f32 %v737
      %vm787 = vweird.f32 %v781
      %vm788 = vmor %vm786, %vm787
      %v789 = vsel %vm788, %v781, %v785
      %v790 = vand.u32 2147483647, %v737
      %vm791 = vcmp.eq.f32.partialorder %v790, 8.507059e+37
      %v792 = vand.u32 %v737, 2147483648
      %v793 = vor.u32 1.1754944e-38, %v792
      %v794 = vsel %vm791, %v793, %v789
      %v795 = vmul.f32 %v481, %v794
      %v796 = vrcp.pop %v738
      %v797 = vmul.f32 %v738, %v796
      %v798 = vsub.f32 1.0, %v797
      %v799 = vmul.f32 %v796, %v798
      %v800 = vadd.f32 %v796, %v799
      %vm801 = vweird.f32 %v738
      %vm802 = vweird.f32 %v796
      %vm803 = vmor %vm801, %vm802
      %v804 = vsel %vm803, %v796, %v800
      %v805 = vand.u32 2147483647, %v738
      %vm806 = vcmp.eq.f32.partialorder %v805, 8.507059e+37
      %v807 = vand.u32 %v738, 2147483648
      %v808 = vor.u32 1.1754944e-38, %v807
      %v809 = vsel %vm806, %v808, %v804
      %v810 = vmul.f32 %v482, %v809
      %v811 = vrcp.pop %v739
      %v812 = vmul.f32 %v739, %v811
      %v813 = vsub.f32 1.0, %v812
      %v814 = vmul.f32 %v811, %v813
      %v815 = vadd.f32 %v811, %v814
      %vm816 = vweird.f32 %v739
      %vm817 = vweird.f32 %v811
      %vm818 = vmor %vm816, %vm817
      %v819 = vsel %vm818, %v811, %v815
      %v820 = vand.u32 2147483647, %v739
      %vm821 = vcmp.eq.f32.partialorder %v820, 8.507059e+37
      %v822 = vand.u32 %v739, 2147483648
      %v823 = vor.u32 1.1754944e-38, %v822
      %v824 = vsel %vm821, %v823, %v819
      %v825 = vmul.f32 %v483, %v824
      %v826 = vrcp.pop %v740
      %v827 = vmul.f32 %v740, %v826
      %v828 = vsub.f32 1.0, %v827
      %v829 = vmul.f32 %v826, %v828
      %v830 = vadd.f32 %v826, %v829
      %vm831 = vweird.f32 %v740
      %vm832 = vweird.f32 %v826
      %vm833 = vmor %vm831, %vm832
      %v834 = vsel %vm833, %v826, %v830
      %v835 = vand.u32 2147483647, %v740
      %vm836 = vcmp.eq.f32.partialorder %v835, 8.507059e+37
      %v837 = vand.u32 %v740, 2147483648
      %v838 = vor.u32 1.1754944e-38, %v837
      %v839 = vsel %vm836, %v838, %v834
      %v840 = vmul.f32 %v484, %v839
      %v841 = vrcp.pop %v741
      %v842 = vmul.f32 %v741, %v841
      %v843 = vsub.f32 1.0, %v842
      %v844 = vmul.f32 %v841, %v843
      %v845 = vadd.f32 %v841, %v844
      %vm846 = vweird.f32 %v741
      %vm847 = vweird.f32 %v841
      %vm848 = vmor %vm846, %vm847
      %v849 = vsel %vm848, %v841, %v845
      %v850 = vand.u32 2147483647, %v741
      %vm851 = vcmp.eq.f32.partialorder %v850, 8.507059e+37
      %v852 = vand.u32 %v741, 2147483648
      %v853 = vor.u32 1.1754944e-38, %v852
      %v854 = vsel %vm851, %v853, %v849
      %v855 = vmul.f32 %v485, %v854
      %v856 = vrcp.pop %v742
      %v857 = vmul.f32 %v742, %v856
      %v858 = vsub.f32 1.0, %v857
      %v859 = vmul.f32 %v856, %v858
      %v860 = vadd.f32 %v856, %v859
      %vm861 = vweird.f32 %v742
      %vm862 = vweird.f32 %v856
      %vm863 = vmor %vm861, %vm862
      %v864 = vsel %vm863, %v856, %v860
      %v865 = vand.u32 2147483647, %v742
      %vm866 = vcmp.eq.f32.partialorder %v865, 8.507059e+37
      %v867 = vand.u32 %v742, 2147483648
      %v868 = vor.u32 1.1754944e-38, %v867
      %v869 = vsel %vm866, %v868, %v864
      %v870 = vmul.f32 %v486, %v869
      %v871 = vrcp.pop %v743
      %v872 = vmul.f32 %v743, %v871
      %v873 = vsub.f32 1.0, %v872
      %v874 = vmul.f32 %v871, %v873
      %v875 = vadd.f32 %v871, %v874
      %vm876 = vweird.f32 %v743
      %vm877 = vweird.f32 %v871
      %vm878 = vmor %vm876, %vm877
      %v879 = vsel %vm878, %v871, %v875
      %v880 = vand.u32 2147483647, %v743
      %vm881 = vcmp.eq.f32.partialorder %v880, 8.507059e+37
      %v882 = vand.u32 %v743, 2147483648
      %v883 = vor.u32 1.1754944e-38, %v882
      %v884 = vsel %vm881, %v883, %v879
      %v885 = vmul.f32 %v487, %v884
      %v886 = vrcp.pop %v744
      %v887 = vmul.f32 %v744, %v886
      %v888 = vsub.f32 1.0, %v887
      %v889 = vmul.f32 %v886, %v888
      %v890 = vadd.f32 %v886, %v889
      %vm891 = vweird.f32 %v744
      %vm892 = vweird.f32 %v886
      %vm893 = vmor %vm891, %vm892
      %v894 = vsel %vm893, %v886, %v890
      %v895 = vand.u32 2147483647, %v744
      %vm896 = vcmp.eq.f32.partialorder %v895, 8.507059e+37
      %v897 = vand.u32 %v744, 2147483648
      %v898 = vor.u32 1.1754944e-38, %v897
      %v899 = vsel %vm896, %v898, %v894
      %v900 = vmul.f32 %v488, %v899
      %v901 = vrcp.pop %v745
      %v902 = vmul.f32 %v745, %v901
      %v903 = vsub.f32 1.0, %v902
      %v904 = vmul.f32 %v901, %v903
      %v905 = vadd.f32 %v901, %v904
      %vm906 = vweird.f32 %v745
      %vm907 = vweird.f32 %v901
      %vm908 = vmor %vm906, %vm907
      %v909 = vsel %vm908, %v901, %v905
      %v910 = vand.u32 2147483647, %v745
      %vm911 = vcmp.eq.f32.partialorder %v910, 8.507059e+37
      %v912 = vand.u32 %v745, 2147483648
      %v913 = vor.u32 1.1754944e-38, %v912
      %v914 = vsel %vm911, %v913, %v909
      %v915 = vmul.f32 %v489, %v914
      %v916 = vrcp.pop %v746
      %v917 = vmul.f32 %v746, %v916
      %v918 = vsub.f32 1.0, %v917
      %v919 = vmul.f32 %v916, %v918
      %v920 = vadd.f32 %v916, %v919
      %vm921 = vweird.f32 %v746
      %vm922 = vweird.f32 %v916
      %vm923 = vmor %vm921, %vm922
      %v924 = vsel %vm923, %v916, %v920
      %v925 = vand.u32 2147483647, %v746
      %vm926 = vcmp.eq.f32.partialorder %v925, 8.507059e+37
      %v927 = vand.u32 %v746, 2147483648
      %v928 = vor.u32 1.1754944e-38, %v927
      %v929 = vsel %vm926, %v928, %v924
      %v930 = vmul.f32 %v490, %v929
      %v931 = vrcp.pop %v747
      %v932 = vmul.f32 %v747, %v931
      %v933 = vsub.f32 1.0, %v932
      %v934 = vmul.f32 %v931, %v933
      %v935 = vadd.f32 %v931, %v934
      %vm936 = vweird.f32 %v747
      %vm937 = vweird.f32 %v931
      %vm938 = vmor %vm936, %vm937
      %v939 = vsel %vm938, %v931, %v935
      %v940 = vand.u32 2147483647, %v747
      %vm941 = vcmp.eq.f32.partialorder %v940, 8.507059e+37
      %v942 = vand.u32 %v747, 2147483648
      %v943 = vor.u32 1.1754944e-38, %v942
      %v944 = vsel %vm941, %v943, %v939
      %v945 = vmul.f32 %v491, %v944
      %v946 = vrcp.pop %v748
      %v947 = vmul.f32 %v748, %v946
      %v948 = vsub.f32 1.0, %v947
      %v949 = vmul.f32 %v946, %v948
      %v950 = vadd.f32 %v946, %v949
      %vm951 = vweird.f32 %v748
      %vm952 = vweird.f32 %v946
      %vm953 = vmor %vm951, %vm952
      %v954 = vsel %vm953, %v946, %v950
      %v955 = vand.u32 2147483647, %v748
      %vm956 = vcmp.eq.f32.partialorder %v955, 8.507059e+37
      %v957 = vand.u32 %v748, 2147483648
      %v958 = vor.u32 1.1754944e-38, %v957
      %v959 = vsel %vm956, %v958, %v954
      %v960 = vmul.f32 %v492, %v959
      %v961 = vrcp.pop %v749
      %v962 = vmul.f32 %v749, %v961
      %v963 = vsub.f32 1.0, %v962
      %v964 = vmul.f32 %v961, %v963
      %v965 = vadd.f32 %v961, %v964
      %vm966 = vweird.f32 %v749
      %vm967 = vweird.f32 %v961
      %vm968 = vmor %vm966, %vm967
      %v969 = vsel %vm968, %v961, %v965
      %v970 = vand.u32 2147483647, %v749
      %vm971 = vcmp.eq.f32.partialorder %v970, 8.507059e+37
      %v972 = vand.u32 %v749, 2147483648
      %v973 = vor.u32 1.1754944e-38, %v972
      %v974 = vsel %vm971, %v973, %v969
      %v975 = vmul.f32 %v493, %v974
      %v976 = vrcp.pop %v750
      %v977 = vmul.f32 %v750, %v976
      %v978 = vsub.f32 1.0, %v977
      %v979 = vmul.f32 %v976, %v978
      %v980 = vadd.f32 %v976, %v979
      %vm981 = vweird.f32 %v750
      %vm982 = vweird.f32 %v976
      %vm983 = vmor %vm981, %vm982
      %v984 = vsel %vm983, %v976, %v980
      %v985 = vand.u32 2147483647, %v750
      %vm986 = vcmp.eq.f32.partialorder %v985, 8.507059e+37
      %v987 = vand.u32 %v750, 2147483648
      %v988 = vor.u32 1.1754944e-38, %v987
      %v989 = vsel %vm986, %v988, %v984
      %v990 = vmul.f32 %v494, %v989
      %991 = vst [vmem:[#allocation3] sm:$0xff] %v765
      %992 = vst [vmem:[#allocation3 + $0x8] sm:$0xff] %v780
      %993 = vst [vmem:[#allocation3 + $0x10] sm:$0xff] %v795
      %994 = vst [vmem:[#allocation3 + $0x18] sm:$0xff] %v810
      %995 = vst [vmem:[#allocation3 + $0x20] sm:$0xff] %v825
      %996 = vst [vmem:[#allocation3 + $0x28] sm:$0xff] %v840
      %997 = vst [vmem:[#allocation3 + $0x30] sm:$0xff] %v855
      %998 = vst [vmem:[#allocation3 + $0x38] sm:$0xff] %v870
      %999 = vst [vmem:[#allocation3 + $0x40] sm:$0xff] %v885
      %1000 = vst [vmem:[#allocation3 + $0x48] sm:$0xff] %v900
      %1001 = vst [vmem:[#allocation3 + $0x50] sm:$0xff] %v915
      %1002 = vst [vmem:[#allocation3 + $0x58] sm:$0xff] %v930
      %1003 = vst [vmem:[#allocation3 + $0x60] sm:$0xff] %v945
      %1004 = vst [vmem:[#allocation3 + $0x68] sm:$0xff] %v960
      %1005 = vst [vmem:[#allocation3 + $0x70] sm:$0xff] %v975
      %1006 = vst [vmem:[#allocation3 + $0x78] sm:$0xff] %v990
      %v1007 = vld [vmem:[%s4] sm:$0xff]
      %v1008 = vld [vmem:[%s4 + $0x8] sm:$0xff]
      %v1009 = vld [vmem:[%s4 + $0x10] sm:$0xff]
      %v1010 = vld [vmem:[%s4 + $0x18] sm:$0xff]
      %v1011 = vld [vmem:[%s4 + $0x20] sm:$0xff]
      %v1012 = vld [vmem:[%s4 + $0x28] sm:$0xff]
      %v1013 = vld [vmem:[%s4 + $0x30] sm:$0xff]
      %v1014 = vld [vmem:[%s4 + $0x38] sm:$0xff]
      %v1015 = vld [vmem:[%s4 + $0x40] sm:$0xff]
      %v1016 = vld [vmem:[%s4 + $0x48] sm:$0xff]
      %v1017 = vld [vmem:[%s4 + $0x50] sm:$0xff]
      %v1018 = vld [vmem:[%s4 + $0x58] sm:$0xff]
      %v1019 = vld [vmem:[%s4 + $0x60] sm:$0xff]
      %v1020 = vld [vmem:[%s4 + $0x68] sm:$0xff]
      %v1021 = vld [vmem:[%s4 + $0x70] sm:$0xff]
      %v1022 = vld [vmem:[%s4 + $0x78] sm:$0xff]
      %v1023 = vadd.f32 %v1007, %v765
      %v1024 = vadd.f32 %v1008, %v780
      %v1025 = vadd.f32 %v1009, %v795
      %v1026 = vadd.f32 %v1010, %v810
      %v1027 = vadd.f32 %v1011, %v825
      %v1028 = vadd.f32 %v1012, %v840
      %v1029 = vadd.f32 %v1013, %v855
      %v1030 = vadd.f32 %v1014, %v870
      %v1031 = vadd.f32 %v1015, %v885
      %v1032 = vadd.f32 %v1016, %v900
      %v1033 = vadd.f32 %v1017, %v915
      %v1034 = vadd.f32 %v1018, %v930
      %v1035 = vadd.f32 %v1019, %v945
      %v1036 = vadd.f32 %v1020, %v960
      %v1037 = vadd.f32 %v1021, %v975
      %v1038 = vadd.f32 %v1022, %v990
      %1039 = vst [vmem:[%s6] sm:$0xff] %v1023
      %1040 = vst [vmem:[%s6 + $0x8] sm:$0xff] %v1024
      %1041 = vst [vmem:[%s6 + $0x10] sm:$0xff] %v1025
      %1042 = vst [vmem:[%s6 + $0x18] sm:$0xff] %v1026
      %1043 = vst [vmem:[%s6 + $0x20] sm:$0xff] %v1027
      %1044 = vst [vmem:[%s6 + $0x28] sm:$0xff] %v1028
      %1045 = vst [vmem:[%s6 + $0x30] sm:$0xff] %v1029
      %1046 = vst [vmem:[%s6 + $0x38] sm:$0xff] %v1030
      %1047 = vst [vmem:[%s6 + $0x40] sm:$0xff] %v1031
      %1048 = vst [vmem:[%s6 + $0x48] sm:$0xff] %v1032
      %1049 = vst [vmem:[%s6 + $0x50] sm:$0xff] %v1033
      %1050 = vst [vmem:[%s6 + $0x58] sm:$0xff] %v1034
      %1051 = vst [vmem:[%s6 + $0x60] sm:$0xff] %v1035
      %1052 = vst [vmem:[%s6 + $0x68] sm:$0xff] %v1036
      %1053 = vst [vmem:[%s6 + $0x70] sm:$0xff] %v1037
      %1054 = vst [vmem:[%s6 + $0x78] sm:$0xff] %v1038
    $region29: #{hgdm_forward.9} parent=1 // pred_fallthru
      _
    // Predicated region
    $region30: #{hgdm_forward.9} parent=1 // pred_check
      _
    $region31: #{hgdm_forward.9} parent=1 // pred_check_branch
      %1056 = sbr.rel (0) target = $region33
    $region32: #{hgdm_forward.9} parent=1 // pred_region
      %1058 = vsyncadd [#allocation4], 0
      %s1059 = sshll.u32 [#allocation3], 4
      %s1060 = int_to_ptr.vmem [resolvable:$true] %s1059
      %s1061 = sshll.u32 %s5, 4
      %s1062 = int_to_ptr.hbm [resolvable:$true] %s1061
      %1067 = dma.vmem_to_hbm [thread:$0]  %s1060, 2048, %s1062, [#allocation4], 128, 128, 8
    $region33: #{hgdm_forward.9} parent=1 // pred_fallthru
      _
    // Predicated region
    $region34: #{hgdm_forward.9} parent=1 // pred_check
      _
    $region35: #{hgdm_forward.9} parent=1 // pred_check_branch
      %1069 = sbr.rel (0) target = $region37
    $region36: #{hgdm_forward.9} parent=1 // pred_region
      _
    $region37: #{hgdm_forward.9} parent=1 // pred_fallthru
      _
    // Predicated region
    $region38: #{hgdm_forward.9} parent=1 // pred_check
      _
    $region39: #{hgdm_forward.9} parent=1 // pred_check_branch
      %1071 = sbr.rel (0) target = $region41
    $region40: #{hgdm_forward.9} parent=1 // pred_region
      %1073 = dma.done [#allocation4], 2048
    $region41: #{hgdm_forward.9} parent=1 // pred_fallthru
      _
    // Predicated region
    $region42: #{hgdm_forward.9} parent=1 // pred_check
      _
    $region43: #{hgdm_forward.9} parent=1 // pred_check_branch
      %1075 = sbr.rel (0) target = $region45
    $region44: #{hgdm_forward.9} parent=1 // pred_region
      _
    $region45: #{hgdm_forward.9} parent=1 // pred_fallthru
      _
    %1076 = vsyncpa [#allocation4], 1

</llo_original>
